<compile_context>
chip_gen: v5e
topology: v5e:2x2
jax: 0.10.0
libtpu: 0.0.40
codegen_flags: <defaults>
</compile_context>

<pallas_src>
import numpy as np
import jax
import jax.numpy as jnp
from jax.experimental import pallas as pl
from jax.experimental.pallas import tpu as pltpu

WINDOW_SIZE = 11
SIGMA = 1.5
VAL_RANGE = 1.0                      # SSIM.forward passes val_range=1
C1 = (0.01 * VAL_RANGE) ** 2
C2 = (0.03 * VAL_RANGE) ** 2


def _gaussian_taps(window_size: int, sigma: float) -> np.ndarray:
    xs = np.arange(window_size, dtype=np.float64)
    g = np.exp(-((xs - window_size // 2) ** 2) / (2.0 * sigma ** 2))
    return g / g.sum()


def create_window_2d(window_size: int, sigma: float = SIGMA) -> jnp.ndarray:
    """Same math as create_window(): outer product of the normalized 1D taps."""
    g = _gaussian_taps(window_size, sigma)
    return jnp.asarray(np.outer(g, g), dtype=jnp.float32)


def _band_matrices(K: int, H: int, W: int, planes: int, sigma: float = SIGMA):
    """Banded matrices so that 'valid' cross-correlation with outer(g, g) equals
    Gh @ P @ Gw.  Gh is replicated block-diagonally 5*planes times so a single
    left matmul processes all five product planes of all `planes` images."""
    g = _gaussian_taps(K, sigma)
    Ho, Wo = H - K + 1, W - K + 1
    gh = np.zeros((Ho, H), dtype=np.float64)
    gw = np.zeros((W, Wo), dtype=np.float64)
    for o in range(Ho):
        gh[o, o:o + K] = g
    for v in range(Wo):
        gw[v:v + K, v] = g
    gh_bd = np.kron(np.eye(5 * planes, dtype=np.float64), gh)   # (5P*Ho, 5P*H)
    return (jnp.asarray(gh_bd, dtype=jnp.float32),
            jnp.asarray(gw, dtype=jnp.float32))


def _pick_planes_per_step(bc: int, h: int, target_rows: int = 256) -> int:
    """Largest divisor P of bc with P*h <= target_rows (contraction ~128-256)."""
    best = 1
    for p in range(1, bc + 1):
        if bc % p == 0 and p * h <= target_rows:
            best = p
    return best


def _ssim_fused_kernel(ghbd_ref, gw_ref, img1_ref, img2_ref, out_ref):
    """One grid step = P (b, c) planes.  Two MXU matmuls do all 5*P convs."""
    x1 = img1_ref[...].astype(jnp.float32)          # (P*H, W)
    x2 = img2_ref[...].astype(jnp.float32)          # (P*H, W)

    # Products computed once; stacked along the sublane axis -> (5*P*H, W).
    stacked = jnp.concatenate([x1, x2, x1 * x1, x2 * x2, x1 * x2], axis=0)

    # Right multiply (shared Gw), then block-diagonal left multiply (Gh).
    t = jnp.dot(stacked, gw_ref[...], preferred_element_type=jnp.float32)   # (5*P*H, Wo)
    r = jnp.dot(ghbd_ref[...], t, preferred_element_type=jnp.float32)       # (5*P*Ho, Wo)

    n = r.shape[0] // 5                              # P*Ho
    mu1 = r[0 * n:1 * n]
    mu2 = r[1 * n:2 * n]
    e11 = r[2 * n:3 * n]
    e22 = r[3 * n:4 * n]
    e12 = r[4 * n:5 * n]

    mu1_sq = mu1 * mu1
    mu2_sq = mu2 * mu2
    mu1_mu2 = mu1 * mu2
    sigma1_sq = e11 - mu1_sq                         # keep in f32 (cancellation)
    sigma2_sq = e22 - mu2_sq
    sigma12 = e12 - mu1_mu2

    v1 = 2.0 * sigma12 + C2
    v2 = sigma1_sq + sigma2_sq + C2
    ssim_map = (2.0 * mu1_mu2 + C1) * v1 / ((mu1_sq + mu2_sq + C1) * v2)

    # Lane-dense store: one full (8, 128) vreg, unmasked vst.
    total = jnp.sum(ssim_map)
    out_ref[...] = jnp.broadcast_to(total, out_ref.shape).astype(jnp.float32)


def ssim_pallas(img1, img2, window_size=WINDOW_SIZE, sigma=SIGMA):
    B, C, H, W = img1.shape
    K = window_size
    assert H >= K and W >= K, "valid-window SSIM requires H, W >= window_size"
    Ho, Wo = H - K + 1, W - K + 1
    BC = B * C

    P = _pick_planes_per_step(BC, H)                 # planes per grid step
    num_steps = BC // P

    gh_bd, gw = _band_matrices(K, H, W, P, sigma)

    # NCHW is row-major contiguous: (B, C, H, W) -> (BC*H, W) is a pure view.
    x1 = img1.reshape(BC * H, W)
    x2 = img2.reshape(BC * H, W)

    partial = pl.pallas_call(
        _ssim_fused_kernel,
        out_shape=jax.ShapeDtypeStruct((num_steps, 8, 128), jnp.float32),
        grid_spec=pltpu.PrefetchScalarGridSpec(
            num_scalar_prefetch=0,
            grid=(num_steps,),
            in_specs=[
                pl.BlockSpec((5 * P * Ho, 5 * P * H), lambda i: (0, 0)),   # Gh (block-diag, shared)
                pl.BlockSpec((W, Wo), lambda i: (0, 0)),                   # Gw (shared)
                pl.BlockSpec((P * H, W), lambda i: (i, 0)),                # img1 slab of P planes
                pl.BlockSpec((P * H, W), lambda i: (i, 0)),                # img2 slab of P planes
            ],
            out_specs=pl.BlockSpec((1, 8, 128), lambda i: (i, 0, 0)),
        ),
        compiler_params=pltpu.CompilerParams(
            dimension_semantics=("parallel",),
            vmem_limit_bytes=32 * 1024 * 1024,        # safe on v5e/v6e/v7x
        ),
    )(gh_bd, gw, x1, x2)

    # size_average=True -> scalar mean over all (B, C, Ho, Wo) elements.
    return jnp.sum(partial[:, 0, 0]) / float(BC * Ho * Wo)


def ssim_ref(img1, img2, window):
    """Pure-JAX reference with the original 121-tap 2D conv (correctness check)."""
    K = window.shape[0]
    B, C, H, W = img1.shape
    Ho, Wo = H - K + 1, W - K + 1

    def conv(x):
        acc = jnp.zeros((B, C, Ho, Wo), jnp.float32)
        for ky in range(K):
            for kx in range(K):
                acc = acc + window[ky, kx] * x[:, :, ky:ky + Ho, kx:kx + Wo]
        return acc

    mu1, mu2 = conv(img1), conv(img2)
    s11 = conv(img1 * img1) - mu1 * mu1
    s22 = conv(img2 * img2) - mu2 * mu2
    s12 = conv(img1 * img2) - mu1 * mu2
    v1 = 2.0 * s12 + C2
    v2 = s11 + s22 + C2
    ssim_map = (2.0 * mu1 * mu2 + C1) * v1 / ((mu1 * mu1 + mu2 * mu2 + C1) * v2)
    return jnp.mean(ssim_map)


if __name__ == "__main__":
    key = jax.random.PRNGKey(0)
    k1, k2 = jax.random.split(key)
    B, C, H, W = 2, 4, 16, 16
    img1 = jax.random.uniform(k1, (B, C, H, W), dtype=jnp.float32)
    img2 = jnp.clip(
        img1 + 0.05 * jax.random.normal(k2, (B, C, H, W), dtype=jnp.float32),
        0.0, 1.0,
    )

    out = jax.block_until_ready(ssim_pallas(img1, img2))
    ref = jax.block_until_ready(ssim_ref(img1, img2, create_window_2d(WINDOW_SIZE)))
    assert jnp.isfinite(out), out
    assert abs(float(out) - float(ref)) < 1e-4, (float(out), float(ref))
    print("KERNEL_OK")
</pallas_src>

<mosaic_0001>
module attributes {stable_mosaic.version = 11 : i64} {
  func.func @_ssim_fused_kernel(%arg0: i32, %arg1: memref<240x640xf32, #tpu.memory_space<vmem>>, %arg2: memref<16x6xf32, #tpu.memory_space<vmem>>, %arg3: memref<128x16xf32, #tpu.memory_space<vmem>>, %arg4: memref<128x16xf32, #tpu.memory_space<vmem>>, %arg5: memref<1x8x128xf32, #tpu.memory_space<vmem>>) attributes {dimension_semantics = [#tpu.dimension_semantics<parallel>], iteration_bounds = array<i64: 1>, scalar_prefetch = 0 : i64, scratch_operands = 0 : i64, tpu.core_type = #tpu.core_type<tc>, window_params = [{pipeline_mode = #tpu.pipeline_mode<synchronous>, transform_indices = @transform_0, window_bounds = array<i64: 240, 640>}, {pipeline_mode = #tpu.pipeline_mode<synchronous>, transform_indices = @transform_1, window_bounds = array<i64: 16, 6>}, {transform_indices = @transform_2, window_bounds = array<i64: 128, 16>}, {transform_indices = @transform_3, window_bounds = array<i64: 128, 16>}, {transform_indices = @transform_4, window_bounds = array<i64: 1, 8, 128>}]} {
    %c0 = arith.constant 0 : index
    %c0_0 = arith.constant 0 : index
    %0 = vector.load %arg3[%c0, %c0_0] : memref<128x16xf32, #tpu.memory_space<vmem>>, vector<128x16xf32>
    %c0_1 = arith.constant 0 : index
    %c0_2 = arith.constant 0 : index
    %1 = vector.load %arg4[%c0_1, %c0_2] : memref<128x16xf32, #tpu.memory_space<vmem>>, vector<128x16xf32>
    %2 = arith.mulf %0, %0 : vector<128x16xf32>
    %3 = arith.mulf %1, %1 : vector<128x16xf32>
    %4 = arith.mulf %0, %1 : vector<128x16xf32>
    %5 = tpu.concatenate %0, %1, %2, %3, %4 in 0 : vector<128x16xf32>, vector<128x16xf32>, vector<128x16xf32>, vector<128x16xf32>, vector<128x16xf32> -> vector<640x16xf32>
    %c0_3 = arith.constant 0 : index
    %c0_4 = arith.constant 0 : index
    %6 = vector.load %arg2[%c0_3, %c0_4] : memref<16x6xf32, #tpu.memory_space<vmem>>, vector<16x6xf32>
    %cst = arith.constant dense<0.000000e+00> : vector<640x6xf32>
    %7 = tpu.matmul %5, %6, %cst {dimension_numbers = #tpu.dot_dimension_numbers<[1], [0], [0], [1], [0, 0, 1, 1], [], []>} : vector<640x16xf32>, vector<16x6xf32>, vector<640x6xf32> -> vector<640x6xf32>
    %c0_5 = arith.constant 0 : index
    %c0_6 = arith.constant 0 : index
    %8 = vector.load %arg1[%c0_5, %c0_6] : memref<240x640xf32, #tpu.memory_space<vmem>>, vector<240x640xf32>
    %cst_7 = arith.constant dense<0.000000e+00> : vector<240x6xf32>
    %9 = tpu.matmul %8, %7, %cst_7 {dimension_numbers = #tpu.dot_dimension_numbers<[1], [0], [0], [1], [0, 0, 1, 1], [], []>} : vector<240x640xf32>, vector<640x6xf32>, vector<240x6xf32> -> vector<240x6xf32>
    %10 = vector.extract_strided_slice %9 {offsets = [0, 0], sizes = [48, 6], strides = [1, 1]} : vector<240x6xf32> to vector<48x6xf32>
    %11 = vector.extract_strided_slice %9 {offsets = [48, 0], sizes = [48, 6], strides = [1, 1]} : vector<240x6xf32> to vector<48x6xf32>
    %12 = vector.extract_strided_slice %9 {offsets = [96, 0], sizes = [48, 6], strides = [1, 1]} : vector<240x6xf32> to vector<48x6xf32>
    %13 = vector.extract_strided_slice %9 {offsets = [144, 0], sizes = [48, 6], strides = [1, 1]} : vector<240x6xf32> to vector<48x6xf32>
    %14 = vector.extract_strided_slice %9 {offsets = [192, 0], sizes = [48, 6], strides = [1, 1]} : vector<240x6xf32> to vector<48x6xf32>
    %15 = arith.mulf %10, %10 : vector<48x6xf32>
    %16 = arith.mulf %11, %11 : vector<48x6xf32>
    %17 = arith.mulf %10, %11 : vector<48x6xf32>
    %18 = arith.subf %12, %15 : vector<48x6xf32>
    %19 = arith.subf %13, %16 : vector<48x6xf32>
    %20 = arith.subf %14, %17 : vector<48x6xf32>
    %cst_8 = arith.constant 2.000000e+00 : f32
    %21 = vector.broadcast %cst_8 : f32 to vector<48x6xf32>
    %22 = arith.mulf %21, %20 : vector<48x6xf32>
    %cst_9 = arith.constant 8.99999984E-4 : f32
    %23 = vector.broadcast %cst_9 : f32 to vector<48x6xf32>
    %24 = arith.addf %22, %23 : vector<48x6xf32>
    %25 = arith.addf %18, %19 : vector<48x6xf32>
    %cst_10 = arith.constant 8.99999984E-4 : f32
    %26 = vector.broadcast %cst_10 : f32 to vector<48x6xf32>
    %27 = arith.addf %25, %26 : vector<48x6xf32>
    %cst_11 = arith.constant 2.000000e+00 : f32
    %28 = vector.broadcast %cst_11 : f32 to vector<48x6xf32>
    %29 = arith.mulf %28, %17 : vector<48x6xf32>
    %cst_12 = arith.constant 9.99999974E-5 : f32
    %30 = vector.broadcast %cst_12 : f32 to vector<48x6xf32>
    %31 = arith.addf %29, %30 : vector<48x6xf32>
    %32 = arith.mulf %31, %24 : vector<48x6xf32>
    %33 = arith.addf %15, %16 : vector<48x6xf32>
    %cst_13 = arith.constant 9.99999974E-5 : f32
    %34 = vector.broadcast %cst_13 : f32 to vector<48x6xf32>
    %35 = arith.addf %33, %34 : vector<48x6xf32>
    %36 = arith.mulf %35, %27 : vector<48x6xf32>
    %37 = arith.divf %32, %36 : vector<48x6xf32>
    %38 = vector.shape_cast %37 : vector<48x6xf32> to vector<1x48x6xf32>
    %cst_14 = arith.constant dense<0.000000e+00> : vector<1xf32>
    %39 = vector.multi_reduction <add>, %38, %cst_14 [1, 2] : vector<1x48x6xf32> to vector<1xf32>
    %40 = vector.shape_cast %39 : vector<1xf32> to vector<1x1x1xf32>
    %41 = vector.extract %40[0, 0, 0] : f32 from vector<1x1x1xf32>
    %42 = vector.broadcast %41 : f32 to vector<1x8x128xf32>
    %c0_15 = arith.constant 0 : index
    %c0_16 = arith.constant 0 : index
    %c0_17 = arith.constant 0 : index
    %43 = vector.load %arg5[%c0_15, %c0_16, %c0_17] : memref<1x8x128xf32, #tpu.memory_space<vmem>>, vector<1x8x128xf32>
    tpu.vector_store %arg5[%c0_15, %c0_16, %c0_17], %42 {strides = array<i32>} : memref<1x8x128xf32, #tpu.memory_space<vmem>>, vector<1x8x128xf32>,
    return
  }
  func.func @transform_0(%arg0: i32) -> (i32, i32) {
    %c0_i32 = arith.constant 0 : i32
    %c0_i32_0 = arith.constant 0 : i32
    %c0_i32_1 = arith.constant 0 : i32
    return %c0_i32, %c0_i32_0 : i32, i32
  }
  func.func @transform_1(%arg0: i32) -> (i32, i32) {
    %c0_i32 = arith.constant 0 : i32
    %c0_i32_0 = arith.constant 0 : i32
    %c0_i32_1 = arith.constant 0 : i32
    return %c0_i32, %c0_i32_0 : i32, i32
  }
  func.func @transform_2(%arg0: i32) -> (i32, i32) {
    %c0_i32 = arith.constant 0 : i32
    %c0_i32_0 = arith.constant 0 : i32
    return %arg0, %c0_i32 : i32, i32
  }
  func.func @transform_3(%arg0: i32) -> (i32, i32) {
    %c0_i32 = arith.constant 0 : i32
    %c0_i32_0 = arith.constant 0 : i32
    return %arg0, %c0_i32 : i32, i32
  }
  func.func @transform_4(%arg0: i32) -> (i32, i32, i32) {
    %c0_i32 = arith.constant 0 : i32
    %c0_i32_0 = arith.constant 0 : i32
    %c0_i32_1 = arith.constant 0 : i32
    return %arg0, %c0_i32, %c0_i32_0 : i32, i32, i32
  }
}

</mosaic_0001>

<llo_original>
// kernel: tpu_custom_call.1
$region0: #{tpu_custom_call.1}
  #allocation0 [shape = 'u32[]', space=smem, size = 0x4, offset = 0x4, fixed_abs, tag = 'smem constant byte address 0x4 - core index']
  #allocation1 [shape = 'u32[72,128]{1,0:T(1,128)}', space=vmem, size = 0x9000, scoped, tag = 'internal scratch']
  %s0 = inlined_call_operand.hbm [shape: f32[240,640], index: 0, kind: input, shape index: {}]
  %s1 = inlined_call_operand.vmem [shape: f32[16,6], index: 1, kind: input, shape index: {}]
  %s2 = inlined_call_operand.vmem [shape: f32[128,16], index: 2, kind: input, shape index: {}]
  %s3 = inlined_call_operand.vmem [shape: f32[128,16], index: 3, kind: input, shape index: {}]
  %s4 = inlined_call_operand.hbm [shape: f32[1,8,128], index: 4, kind: output, shape index: {}]
  %s5 = sld [smem:[#allocation0]]
  $region30: #{tpu_custom_call.1} parent=0
    _
  %s7 = ssub.s32 1, %s5
  %s8 = scalar_select 0, %s7, %s5
  $region1: #{tpu_custom_call.1} parent=0
    #allocation2 [shape = 'u8[614400]{0}', space=vmem, size = 0x96000, scoped, tag = 'input window, operand 0, single buffered']
    #allocation3 [shape = 's32[1]{0}', space=sflag, size = 0x4, scoped, tag = 'scoped memory for tpu_custom_call.1']
    #allocation4 [shape = 's32[1]{0}', space=sflag, size = 0x4, scoped, tag = 'scoped memory for tpu_custom_call.1']
    #allocation5 [shape = 'u8[4096]{0}', space=vmem, size = 0x1000, scoped, tag = 'output window, operand 0, single buffered']
    %9 = vsyncpa [#allocation3], 0
    %10 = vsyncpa [#allocation4], 0
    // Predicated region
    $region2: #{tpu_custom_call.1} parent=1 // pred_check
      _
    $region3: #{tpu_custom_call.1} parent=1 // pred_check_branch
      %12 = sbr.rel (0) target = $region5
    $region4: #{tpu_custom_call.1} parent=1 // pred_region
      %14 = vsyncadd [#allocation3], 0
      %s15 = sshll.u32 %s0, 4
      %s16 = int_to_ptr.hbm [resolvable:$true] %s15
      %s17 = sshll.u32 [#allocation2], 4
      %s18 = int_to_ptr.vmem [resolvable:$true] %s17
      %23 = dma.hbm_to_vmem [thread:$0]  %s16, 19200, %s18, [#allocation3], 640, 640, 40
    $region5: #{tpu_custom_call.1} parent=1 // pred_fallthru
      _
    // Predicated region
    $region6: #{tpu_custom_call.1} parent=1 // pred_check
      _
    $region7: #{tpu_custom_call.1} parent=1 // pred_check_branch
      %25 = sbr.rel (0) target = $region9
    $region8: #{tpu_custom_call.1} parent=1 // pred_region
      _
    $region9: #{tpu_custom_call.1} parent=1 // pred_fallthru
      _
    // Predicated region
    $region10: #{tpu_custom_call.1} parent=1 // pred_check
      _
    $region11: #{tpu_custom_call.1} parent=1 // pred_check_branch
      %27 = sbr.rel (0) target = $region13
    $region12: #{tpu_custom_call.1} parent=1 // pred_region
      _
    $region13: #{tpu_custom_call.1} parent=1 // pred_fallthru
      _
    // Predicated region
    $region14: #{tpu_custom_call.1} parent=1 // pred_check
      _
    $region15: #{tpu_custom_call.1} parent=1 // pred_check_branch
      %29 = sbr.rel (0) target = $region17
    $region16: #{tpu_custom_call.1} parent=1 // pred_region
      _
    $region17: #{tpu_custom_call.1} parent=1 // pred_fallthru
      _
    // Predicated region
    $region18: #{tpu_custom_call.1} parent=1 // pred_check
      _
    $region19: #{tpu_custom_call.1} parent=1 // pred_check_branch
      %31 = sbr.rel (0) target = $region21
    $region20: #{tpu_custom_call.1} parent=1 // pred_region
      %33 = dma.done [#allocation3], 19200
    $region21: #{tpu_custom_call.1} parent=1 // pred_fallthru
      _
    %v34 = vld [vmem:[%s2] sm:$0xff]
    %v35 = vld [vmem:[%s2 + $0x8] sm:$0xff]
    %v36 = vld [vmem:[%s2 + $0x10] sm:$0xff]
    %v37 = vld [vmem:[%s2 + $0x18] sm:$0xff]
    %v38 = vld [vmem:[%s2 + $0x20] sm:$0xff]
    %v39 = vld [vmem:[%s2 + $0x28] sm:$0xff]
    %v40 = vld [vmem:[%s2 + $0x30] sm:$0xff]
    %v41 = vld [vmem:[%s2 + $0x38] sm:$0xff]
    %v42 = vld [vmem:[%s2 + $0x40] sm:$0xff]
    %v43 = vld [vmem:[%s2 + $0x48] sm:$0xff]
    %v44 = vld [vmem:[%s2 + $0x50] sm:$0xff]
    %v45 = vld [vmem:[%s2 + $0x58] sm:$0xff]
    %v46 = vld [vmem:[%s2 + $0x60] sm:$0xff]
    %v47 = vld [vmem:[%s2 + $0x68] sm:$0xff]
    %v48 = vld [vmem:[%s2 + $0x70] sm:$0xff]
    %v49 = vld [vmem:[%s2 + $0x78] sm:$0xff]
    %v50 = vld [vmem:[%s3] sm:$0xff]
    %v51 = vld [vmem:[%s3 + $0x8] sm:$0xff]
    %v52 = vld [vmem:[%s3 + $0x10] sm:$0xff]
    %v53 = vld [vmem:[%s3 + $0x18] sm:$0xff]
    %v54 = vld [vmem:[%s3 + $0x20] sm:$0xff]
    %v55 = vld [vmem:[%s3 + $0x28] sm:$0xff]
    %v56 = vld [vmem:[%s3 + $0x30] sm:$0xff]
    %v57 = vld [vmem:[%s3 + $0x38] sm:$0xff]
    %v58 = vld [vmem:[%s3 + $0x40] sm:$0xff]
    %v59 = vld [vmem:[%s3 + $0x48] sm:$0xff]
    %v60 = vld [vmem:[%s3 + $0x50] sm:$0xff]
    %v61 = vld [vmem:[%s3 + $0x58] sm:$0xff]
    %v62 = vld [vmem:[%s3 + $0x60] sm:$0xff]
    %v63 = vld [vmem:[%s3 + $0x68] sm:$0xff]
    %v64 = vld [vmem:[%s3 + $0x70] sm:$0xff]
    %v65 = vld [vmem:[%s3 + $0x78] sm:$0xff]
    %v66 = vmul.f32 %v34, %v34
    %v67 = vmul.f32 %v35, %v35
    %v68 = vmul.f32 %v36, %v36
    %v69 = vmul.f32 %v37, %v37
    %v70 = vmul.f32 %v38, %v38
    %v71 = vmul.f32 %v39, %v39
    %v72 = vmul.f32 %v40, %v40
    %v73 = vmul.f32 %v41, %v41
    %v74 = vmul.f32 %v42, %v42
    %v75 = vmul.f32 %v43, %v43
    %v76 = vmul.f32 %v44, %v44
    %v77 = vmul.f32 %v45, %v45
    %v78 = vmul.f32 %v46, %v46
    %v79 = vmul.f32 %v47, %v47
    %v80 = vmul.f32 %v48, %v48
    %v81 = vmul.f32 %v49, %v49
    %v82 = vmul.f32 %v50, %v50
    %v83 = vmul.f32 %v51, %v51
    %v84 = vmul.f32 %v52, %v52
    %v85 = vmul.f32 %v53, %v53
    %v86 = vmul.f32 %v54, %v54
    %v87 = vmul.f32 %v55, %v55
    %v88 = vmul.f32 %v56, %v56
    %v89 = vmul.f32 %v57, %v57
    %v90 = vmul.f32 %v58, %v58
    %v91 = vmul.f32 %v59, %v59
    %v92 = vmul.f32 %v60, %v60
    %v93 = vmul.f32 %v61, %v61
    %v94 = vmul.f32 %v62, %v62
    %v95 = vmul.f32 %v63, %v63
    %v96 = vmul.f32 %v64, %v64
    %v97 = vmul.f32 %v65, %v65
    %v98 = vmul.f32 %v34, %v50
    %v99 = vmul.f32 %v35, %v51
    %v100 = vmul.f32 %v36, %v52
    %v101 = vmul.f32 %v37, %v53
    %v102 = vmul.f32 %v38, %v54
    %v103 = vmul.f32 %v39, %v55
    %v104 = vmul.f32 %v40, %v56
    %v105 = vmul.f32 %v41, %v57
    %v106 = vmul.f32 %v42, %v58
    %v107 = vmul.f32 %v43, %v59
    %v108 = vmul.f32 %v44, %v60
    %v109 = vmul.f32 %v45, %v61
    %v110 = vmul.f32 %v46, %v62
    %v111 = vmul.f32 %v47, %v63
    %v112 = vmul.f32 %v48, %v64
    %v113 = vmul.f32 %v49, %v65
    %v114 = vld [vmem:[%s1] sm:$0xff]
    %v115 = vld [vmem:[%s1 + $0x8] sm:$0xff]
    %vm116 = vcmask 130048
    %v118 = vsel %vm116, %v34, 0
    %v121 = vsel %vm116, %v35, 0
    %v124 = vsel %vm116, %v36, 0
    %v127 = vsel %vm116, %v37, 0
    %v130 = vsel %vm116, %v38, 0
    %v133 = vsel %vm116, %v39, 0
    %v136 = vsel %vm116, %v40, 0
    %v139 = vsel %vm116, %v41, 0
    %v142 = vsel %vm116, %v42, 0
    %v145 = vsel %vm116, %v43, 0
    %v148 = vsel %vm116, %v44, 0
    %v151 = vsel %vm116, %v45, 0
    %v154 = vsel %vm116, %v46, 0
    %v157 = vsel %vm116, %v47, 0
    %v160 = vsel %vm116, %v48, 0
    %v163 = vsel %vm116, %v49, 0
    %v166 = vsel %vm116, %v50, 0
    %v169 = vsel %vm116, %v51, 0
    %v172 = vsel %vm116, %v52, 0
    %v175 = vsel %vm116, %v53, 0
    %v178 = vsel %vm116, %v54, 0
    %v181 = vsel %vm116, %v55, 0
    %v184 = vsel %vm116, %v56, 0
    %v187 = vsel %vm116, %v57, 0
    %v190 = vsel %vm116, %v58, 0
    %v193 = vsel %vm116, %v59, 0
    %v196 = vsel %vm116, %v60, 0
    %v199 = vsel %vm116, %v61, 0
    %v202 = vsel %vm116, %v62, 0
    %v205 = vsel %vm116, %v63, 0
    %v208 = vsel %vm116, %v64, 0
    %v211 = vsel %vm116, %v65, 0
    %v214 = vsel %vm116, %v66, 0
    %v217 = vsel %vm116, %v67, 0
    %v220 = vsel %vm116, %v68, 0
    %v223 = vsel %vm116, %v69, 0
    %v226 = vsel %vm116, %v70, 0
    %v229 = vsel %vm116, %v71, 0
    %v232 = vsel %vm116, %v72, 0
    %v235 = vsel %vm116, %v73, 0
    %v238 = vsel %vm116, %v74, 0
    %v241 = vsel %vm116, %v75, 0
    %v244 = vsel %vm116, %v76, 0
    %v247 = vsel %vm116, %v77, 0
    %v250 = vsel %vm116, %v78, 0
    %v253 = vsel %vm116, %v79, 0
    %v256 = vsel %vm116, %v80, 0
    %v259 = vsel %vm116, %v81, 0
    %v262 = vsel %vm116, %v82, 0
    %v265 = vsel %vm116, %v83, 0
    %v268 = vsel %vm116, %v84, 0
    %v271 = vsel %vm116, %v85, 0
    %v274 = vsel %vm116, %v86, 0
    %v277 = vsel %vm116, %v87, 0
    %v280 = vsel %vm116, %v88, 0
    %v283 = vsel %vm116, %v89, 0
    %v286 = vsel %vm116, %v90, 0
    %v289 = vsel %vm116, %v91, 0
    %v292 = vsel %vm116, %v92, 0
    %v295 = vsel %vm116, %v93, 0
    %v298 = vsel %vm116, %v94, 0
    %v301 = vsel %vm116, %v95, 0
    %v304 = vsel %vm116, %v96, 0
    %v307 = vsel %vm116, %v97, 0
    %v310 = vsel %vm116, %v98, 0
    %v313 = vsel %vm116, %v99, 0
    %v316 = vsel %vm116, %v100, 0
    %v319 = vsel %vm116, %v101, 0
    %v322 = vsel %vm116, %v102, 0
    %v325 = vsel %vm116, %v103, 0
    %v328 = vsel %vm116, %v104, 0
    %v331 = vsel %vm116, %v105, 0
    %v334 = vsel %vm116, %v106, 0
    %v337 = vsel %vm116, %v107, 0
    %v340 = vsel %vm116, %v108, 0
    %v343 = vsel %vm116, %v109, 0
    %v346 = vsel %vm116, %v110, 0
    %v349 = vsel %vm116, %v111, 0
    %v352 = vsel %vm116, %v112, 0
    %v355 = vsel %vm116, %v113, 0
    %357 = vmatpush.msra.mxu0 0.0
    %358 = vmatpush.msra.mxu0 0.0
    %359 = vmatpush.msra.mxu0 0.0
    %360 = vmatpush.msra.mxu0 0.0
    %361 = vmatpush.msra.mxu0 0.0
    %362 = vmatpush.msra.mxu0 0.0
    %363 = vmatpush.msra.mxu0 0.0
    %364 = vmatpush.msra.mxu0 0.0
    %365 = vmatpush.msra.mxu0 0.0
    %366 = vmatpush.msra.mxu0 0.0
    %367 = vmatpush.msra.mxu0 0.0
    %368 = vmatpush.msra.mxu0 0.0
    %369 = vmatpush.msra.mxu0 0.0
    %370 = vmatpush.msra.mxu0 0.0
    %371 = vmatpush.msra.mxu0 %v115
    %372 = vmatpush.msra.mxu0 %v114
    %373 = vmatmul.f32.gmra.mxu0 %v118
    %v374 = vpop.f32.mrf.mxu0
    %v375 = vadd.f32 0.0, %v374
    %376 = vmatmul.f32.gmra.mxu0 %v121
    %v377 = vpop.f32.mrf.mxu0
    %v378 = vadd.f32 0.0, %v377
    %379 = vmatmul.f32.gmra.mxu0 %v124
    %v380 = vpop.f32.mrf.mxu0
    %v381 = vadd.f32 0.0, %v380
    %382 = vmatmul.f32.gmra.mxu0 %v127
    %v383 = vpop.f32.mrf.mxu0
    %v384 = vadd.f32 0.0, %v383
    %385 = vmatmul.f32.gmra.mxu0 %v130
    %v386 = vpop.f32.mrf.mxu0
    %v387 = vadd.f32 0.0, %v386
    %388 = vmatmul.f32.gmra.mxu0 %v133
    %v389 = vpop.f32.mrf.mxu0
    %v390 = vadd.f32 0.0, %v389
    %391 = vmatmul.f32.gmra.mxu0 %v136
    %v392 = vpop.f32.mrf.mxu0
    %v393 = vadd.f32 0.0, %v392
    %394 = vmatmul.f32.gmra.mxu0 %v139
    %v395 = vpop.f32.mrf.mxu0
    %v396 = vadd.f32 0.0, %v395
    %397 = vmatmul.f32.gmra.mxu0 %v142
    %v398 = vpop.f32.mrf.mxu0
    %v399 = vadd.f32 0.0, %v398
    %400 = vmatmul.f32.gmra.mxu0 %v145
    %v401 = vpop.f32.mrf.mxu0
    %v402 = vadd.f32 0.0, %v401
    %403 = vmatmul.f32.gmra.mxu0 %v148
    %v404 = vpop.f32.mrf.mxu0
    %v405 = vadd.f32 0.0, %v404
    %406 = vmatmul.f32.gmra.mxu0 %v151
    %v407 = vpop.f32.mrf.mxu0
    %v408 = vadd.f32 0.0, %v407
    %409 = vmatmul.f32.gmra.mxu0 %v154
    %v410 = vpop.f32.mrf.mxu0
    %v411 = vadd.f32 0.0, %v410
    %412 = vmatmul.f32.gmra.mxu0 %v157
    %v413 = vpop.f32.mrf.mxu0
    %v414 = vadd.f32 0.0, %v413
    %415 = vmatmul.f32.gmra.mxu0 %v160
    %v416 = vpop.f32.mrf.mxu0
    %v417 = vadd.f32 0.0, %v416
    %418 = vmatmul.f32.gmra.mxu0 %v163
    %v419 = vpop.f32.mrf.mxu0
    %v420 = vadd.f32 0.0, %v419
    %421 = vmatmul.f32.gmra.mxu0 %v166
    %v422 = vpop.f32.mrf.mxu0
    %v423 = vadd.f32 0.0, %v422
    %424 = vmatmul.f32.gmra.mxu0 %v169
    %v425 = vpop.f32.mrf.mxu0
    %v426 = vadd.f32 0.0, %v425
    %427 = vmatmul.f32.gmra.mxu0 %v172
    %v428 = vpop.f32.mrf.mxu0
    %v429 = vadd.f32 0.0, %v428
    %430 = vmatmul.f32.gmra.mxu0 %v175
    %v431 = vpop.f32.mrf.mxu0
    %v432 = vadd.f32 0.0, %v431
    %433 = vmatmul.f32.gmra.mxu0 %v178
    %v434 = vpop.f32.mrf.mxu0
    %v435 = vadd.f32 0.0, %v434
    %436 = vmatmul.f32.gmra.mxu0 %v181
    %v437 = vpop.f32.mrf.mxu0
    %v438 = vadd.f32 0.0, %v437
    %439 = vmatmul.f32.gmra.mxu0 %v184
    %v440 = vpop.f32.mrf.mxu0
    %v441 = vadd.f32 0.0, %v440
    %442 = vmatmul.f32.gmra.mxu0 %v187
    %v443 = vpop.f32.mrf.mxu0
    %v444 = vadd.f32 0.0, %v443
    %445 = vmatmul.f32.gmra.mxu0 %v190
    %v446 = vpop.f32.mrf.mxu0
    %v447 = vadd.f32 0.0, %v446
    %448 = vmatmul.f32.gmra.mxu0 %v193
    %v449 = vpop.f32.mrf.mxu0
    %v450 = vadd.f32 0.0, %v449
    %451 = vmatmul.f32.gmra.mxu0 %v196
    %v452 = vpop.f32.mrf.mxu0
    %v453 = vadd.f32 0.0, %v452
    %454 = vmatmul.f32.gmra.mxu0 %v199
    %v455 = vpop.f32.mrf.mxu0
    %v456 = vadd.f32 0.0, %v455
    %457 = vmatmul.f32.gmra.mxu0 %v202
    %v458 = vpop.f32.mrf.mxu0
    %v459 = vadd.f32 0.0, %v458
    %460 = vmatmul.f32.gmra.mxu0 %v205
    %v461 = vpop.f32.mrf.mxu0
    %v462 = vadd.f32 0.0, %v461
    %463 = vmatmul.f32.gmra.mxu0 %v208
    %v464 = vpop.f32.mrf.mxu0
    %v465 = vadd.f32 0.0, %v464
    %466 = vmatmul.f32.gmra.mxu0 %v211
    %v467 = vpop.f32.mrf.mxu0
    %v468 = vadd.f32 0.0, %v467
    %469 = vmatmul.f32.gmra.mxu0 %v214
    %v470 = vpop.f32.mrf.mxu0
    %v471 = vadd.f32 0.0, %v470
    %472 = vmatmul.f32.gmra.mxu0 %v217
    %v473 = vpop.f32.mrf.mxu0
    %v474 = vadd.f32 0.0, %v473
    %475 = vmatmul.f32.gmra.mxu0 %v220
    %v476 = vpop.f32.mrf.mxu0
    %v477 = vadd.f32 0.0, %v476
    %478 = vmatmul.f32.gmra.mxu0 %v223
    %v479 = vpop.f32.mrf.mxu0
    %v480 = vadd.f32 0.0, %v479
    %481 = vmatmul.f32.gmra.mxu0 %v226
    %v482 = vpop.f32.mrf.mxu0
    %v483 = vadd.f32 0.0, %v482
    %484 = vmatmul.f32.gmra.mxu0 %v229
    %v485 = vpop.f32.mrf.mxu0
    %v486 = vadd.f32 0.0, %v485
    %487 = vmatmul.f32.gmra.mxu0 %v232
    %v488 = vpop.f32.mrf.mxu0
    %v489 = vadd.f32 0.0, %v488
    %490 = vmatmul.f32.gmra.mxu0 %v235
    %v491 = vpop.f32.mrf.mxu0
    %v492 = vadd.f32 0.0, %v491
    %493 = vmatmul.f32.gmra.mxu0 %v238
    %v494 = vpop.f32.mrf.mxu0
    %v495 = vadd.f32 0.0, %v494
    %496 = vmatmul.f32.gmra.mxu0 %v241
    %v497 = vpop.f32.mrf.mxu0
    %v498 = vadd.f32 0.0, %v497
    %499 = vmatmul.f32.gmra.mxu0 %v244
    %v500 = vpop.f32.mrf.mxu0
    %v501 = vadd.f32 0.0, %v500
    %502 = vmatmul.f32.gmra.mxu0 %v247
    %v503 = vpop.f32.mrf.mxu0
    %v504 = vadd.f32 0.0, %v503
    %505 = vmatmul.f32.gmra.mxu0 %v250
    %v506 = vpop.f32.mrf.mxu0
    %v507 = vadd.f32 0.0, %v506
    %508 = vmatmul.f32.gmra.mxu0 %v253
    %v509 = vpop.f32.mrf.mxu0
    %v510 = vadd.f32 0.0, %v509
    %511 = vmatmul.f32.gmra.mxu0 %v256
    %v512 = vpop.f32.mrf.mxu0
    %v513 = vadd.f32 0.0, %v512
    %514 = vmatmul.f32.gmra.mxu0 %v259
    %v515 = vpop.f32.mrf.mxu0
    %v516 = vadd.f32 0.0, %v515
    %517 = vmatmul.f32.gmra.mxu0 %v262
    %v518 = vpop.f32.mrf.mxu0
    %v519 = vadd.f32 0.0, %v518
    %520 = vmatmul.f32.gmra.mxu0 %v265
    %v521 = vpop.f32.mrf.mxu0
    %v522 = vadd.f32 0.0, %v521
    %523 = vmatmul.f32.gmra.mxu0 %v268
    %v524 = vpop.f32.mrf.mxu0
    %v525 = vadd.f32 0.0, %v524
    %526 = vmatmul.f32.gmra.mxu0 %v271
    %v527 = vpop.f32.mrf.mxu0
    %v528 = vadd.f32 0.0, %v527
    %529 = vmatmul.f32.gmra.mxu0 %v274
    %v530 = vpop.f32.mrf.mxu0
    %v531 = vadd.f32 0.0, %v530
    %532 = vmatmul.f32.gmra.mxu0 %v277
    %v533 = vpop.f32.mrf.mxu0
    %v534 = vadd.f32 0.0, %v533
    %535 = vmatmul.f32.gmra.mxu0 %v280
    %v536 = vpop.f32.mrf.mxu0
    %v537 = vadd.f32 0.0, %v536
    %538 = vmatmul.f32.gmra.mxu0 %v283
    %v539 = vpop.f32.mrf.mxu0
    %v540 = vadd.f32 0.0, %v539
    %541 = vmatmul.f32.gmra.mxu0 %v286
    %v542 = vpop.f32.mrf.mxu0
    %v543 = vadd.f32 0.0, %v542
    %544 = vmatmul.f32.gmra.mxu0 %v289
    %v545 = vpop.f32.mrf.mxu0
    %v546 = vadd.f32 0.0, %v545
    %547 = vmatmul.f32.gmra.mxu0 %v292
    %v548 = vpop.f32.mrf.mxu0
    %v549 = vadd.f32 0.0, %v548
    %550 = vmatmul.f32.gmra.mxu0 %v295
    %v551 = vpop.f32.mrf.mxu0
    %v552 = vadd.f32 0.0, %v551
    %553 = vmatmul.f32.gmra.mxu0 %v298
    %v554 = vpop.f32.mrf.mxu0
    %v555 = vadd.f32 0.0, %v554
    %556 = vmatmul.f32.gmra.mxu0 %v301
    %v557 = vpop.f32.mrf.mxu0
    %v558 = vadd.f32 0.0, %v557
    %559 = vmatmul.f32.gmra.mxu0 %v304
    %v560 = vpop.f32.mrf.mxu0
    %v561 = vadd.f32 0.0, %v560
    %562 = vmatmul.f32.gmra.mxu0 %v307
    %v563 = vpop.f32.mrf.mxu0
    %v564 = vadd.f32 0.0, %v563
    %565 = vmatmul.f32.gmra.mxu0 %v310
    %v566 = vpop.f32.mrf.mxu0
    %v567 = vadd.f32 0.0, %v566
    %568 = vmatmul.f32.gmra.mxu0 %v313
    %v569 = vpop.f32.mrf.mxu0
    %v570 = vadd.f32 0.0, %v569
    %571 = vmatmul.f32.gmra.mxu0 %v316
    %v572 = vpop.f32.mrf.mxu0
    %v573 = vadd.f32 0.0, %v572
    %574 = vmatmul.f32.gmra.mxu0 %v319
    %v575 = vpop.f32.mrf.mxu0
    %v576 = vadd.f32 0.0, %v575
    %577 = vmatmul.f32.gmra.mxu0 %v322
    %v578 = vpop.f32.mrf.mxu0
    %v579 = vadd.f32 0.0, %v578
    %580 = vmatmul.f32.gmra.mxu0 %v325
    %v581 = vpop.f32.mrf.mxu0
    %v582 = vadd.f32 0.0, %v581
    %583 = vmatmul.f32.gmra.mxu0 %v328
    %v584 = vpop.f32.mrf.mxu0
    %v585 = vadd.f32 0.0, %v584
    %586 = vmatmul.f32.gmra.mxu0 %v331
    %v587 = vpop.f32.mrf.mxu0
    %v588 = vadd.f32 0.0, %v587
    %589 = vmatmul.f32.gmra.mxu0 %v334
    %v590 = vpop.f32.mrf.mxu0
    %v591 = vadd.f32 0.0, %v590
    %592 = vmatmul.f32.gmra.mxu0 %v337
    %v593 = vpop.f32.mrf.mxu0
    %v594 = vadd.f32 0.0, %v593
    %595 = vmatmul.f32.gmra.mxu0 %v340
    %v596 = vpop.f32.mrf.mxu0
    %v597 = vadd.f32 0.0, %v596
    %598 = vmatmul.f32.gmra.mxu0 %v343
    %v599 = vpop.f32.mrf.mxu0
    %v600 = vadd.f32 0.0, %v599
    %601 = vmatmul.f32.gmra.mxu0 %v346
    %v602 = vpop.f32.mrf.mxu0
    %v603 = vadd.f32 0.0, %v602
    %604 = vmatmul.f32.gmra.mxu0 %v349
    %v605 = vpop.f32.mrf.mxu0
    %v606 = vadd.f32 0.0, %v605
    %607 = vmatmul.f32.gmra.mxu0 %v352
    %v608 = vpop.f32.mrf.mxu0
    %v609 = vadd.f32 0.0, %v608
    %610 = vmatmul.f32.gmra.mxu0 %v355
    %v611 = vpop.f32.mrf.mxu0
    %v612 = vadd.f32 0.0, %v611
    %613 = vdwg.mxu0
    %v614 = vld [vmem:[#allocation2] sm:$0xff]
    %v615 = vld [vmem:[#allocation2 + $0x8] sm:$0xff]
    %v616 = vld [vmem:[#allocation2 + $0x10] sm:$0xff]
    %v617 = vld [vmem:[#allocation2 + $0x18] sm:$0xff]
    %v618 = vld [vmem:[#allocation2 + $0x20] sm:$0xff]
    %v619 = vld [vmem:[#allocation2 + $0x28] sm:$0xff]
    %v620 = vld [vmem:[#allocation2 + $0x30] sm:$0xff]
    %v621 = vld [vmem:[#allocation2 + $0x38] sm:$0xff]
    %v622 = vld [vmem:[#allocation2 + $0x40] sm:$0xff]
    %v623 = vld [vmem:[#allocation2 + $0x48] sm:$0xff]
    %v624 = vld [vmem:[#allocation2 + $0x50] sm:$0xff]
    %v625 = vld [vmem:[#allocation2 + $0x58] sm:$0xff]
    %v626 = vld [vmem:[#allocation2 + $0x60] sm:$0xff]
    %v627 = vld [vmem:[#allocation2 + $0x68] sm:$0xff]
    %v628 = vld [vmem:[#allocation2 + $0x70] sm:$0xff]
    %v629 = vld [vmem:[#allocation2 + $0x78] sm:$0xff]
    %v630 = vld [vmem:[#allocation2 + $0x80] sm:$0xff]
    %v631 = vld [vmem:[#allocation2 + $0x88] sm:$0xff]
    %v632 = vld [vmem:[#allocation2 + $0x90] sm:$0xff]
    %v633 = vld [vmem:[#allocation2 + $0x98] sm:$0xff]
    %v634 = vld [vmem:[#allocation2 + $0xa0] sm:$0xff]
    %v635 = vld [vmem:[#allocation2 + $0xa8] sm:$0xff]
    %v636 = vld [vmem:[#allocation2 + $0xb0] sm:$0xff]
    %v637 = vld [vmem:[#allocation2 + $0xb8] sm:$0xff]
    %v638 = vld [vmem:[#allocation2 + $0xc0] sm:$0xff]
    %v639 = vld [vmem:[#allocation2 + $0xc8] sm:$0xff]
    %v640 = vld [vmem:[#allocation2 + $0xd0] sm:$0xff]
    %v641 = vld [vmem:[#allocation2 + $0xd8] sm:$0xff]
    %v642 = vld [vmem:[#allocation2 + $0xe0] sm:$0xff]
    %v643 = vld [vmem:[#allocation2 + $0xe8] sm:$0xff]
    %v644 = vld [vmem:[#allocation2 + $0xf0] sm:$0xff]
    %v645 = vld [vmem:[#allocation2 + $0xf8] sm:$0xff]
    %v646 = vld [vmem:[#allocation2 + $0x100] sm:$0xff]
    %v647 = vld [vmem:[#allocation2 + $0x108] sm:$0xff]
    %v648 = vld [vmem:[#allocation2 + $0x110] sm:$0xff]
    %v649 = vld [vmem:[#allocation2 + $0x118] sm:$0xff]
    %v650 = vld [vmem:[#allocation2 + $0x120] sm:$0xff]
    %v651 = vld [vmem:[#allocation2 + $0x128] sm:$0xff]
    %v652 = vld [vmem:[#allocation2 + $0x130] sm:$0xff]
    %v653 = vld [vmem:[#allocation2 + $0x138] sm:$0xff]
    %v654 = vld [vmem:[#allocation2 + $0x140] sm:$0xff]
    %v655 = vld [vmem:[#allocation2 + $0x148] sm:$0xff]
    %v656 = vld [vmem:[#allocation2 + $0x150] sm:$0xff]
    %v657 = vld [vmem:[#allocation2 + $0x158] sm:$0xff]
    %v658 = vld [vmem:[#allocation2 + $0x160] sm:$0xff]
    %v659 = vld [vmem:[#allocation2 + $0x168] sm:$0xff]
    %v660 = vld [vmem:[#allocation2 + $0x170] sm:$0xff]
    %v661 = vld [vmem:[#allocation2 + $0x178] sm:$0xff]
    %v662 = vld [vmem:[#allocation2 + $0x180] sm:$0xff]
    %v663 = vld [vmem:[#allocation2 + $0x188] sm:$0xff]
    %v664 = vld [vmem:[#allocation2 + $0x190] sm:$0xff]
    %v665 = vld [vmem:[#allocation2 + $0x198] sm:$0xff]
    %v666 = vld [vmem:[#allocation2 + $0x1a0] sm:$0xff]
    %v667 = vld [vmem:[#allocation2 + $0x1a8] sm:$0xff]
    %v668 = vld [vmem:[#allocation2 + $0x1b0] sm:$0xff]
    %v669 = vld [vmem:[#allocation2 + $0x1b8] sm:$0xff]
    %v670 = vld [vmem:[#allocation2 + $0x1c0] sm:$0xff]
    %v671 = vld [vmem:[#allocation2 + $0x1c8] sm:$0xff]
    %v672 = vld [vmem:[#allocation2 + $0x1d0] sm:$0xff]
    %v673 = vld [vmem:[#allocation2 + $0x1d8] sm:$0xff]
    %v674 = vld [vmem:[#allocation2 + $0x1e0] sm:$0xff]
    %v675 = vld [vmem:[#allocation2 + $0x1e8] sm:$0xff]
    %v676 = vld [vmem:[#allocation2 + $0x1f0] sm:$0xff]
    %v677 = vld [vmem:[#allocation2 + $0x1f8] sm:$0xff]
    %v678 = vld [vmem:[#allocation2 + $0x200] sm:$0xff]
    %v679 = vld [vmem:[#allocation2 + $0x208] sm:$0xff]
    %v680 = vld [vmem:[#allocation2 + $0x210] sm:$0xff]
    %v681 = vld [vmem:[#allocation2 + $0x218] sm:$0xff]
    %v682 = vld [vmem:[#allocation2 + $0x220] sm:$0xff]
    %v683 = vld [vmem:[#allocation2 + $0x228] sm:$0xff]
    %v684 = vld [vmem:[#allocation2 + $0x230] sm:$0xff]
    %v685 = vld [vmem:[#allocation2 + $0x238] sm:$0xff]
    %v686 = vld [vmem:[#allocation2 + $0x240] sm:$0xff]
    %v687 = vld [vmem:[#allocation2 + $0x248] sm:$0xff]
    %v688 = vld [vmem:[#allocation2 + $0x250] sm:$0xff]
    %v689 = vld [vmem:[#allocation2 + $0x258] sm:$0xff]
    %v690 = vld [vmem:[#allocation2 + $0x260] sm:$0xff]
    %v691 = vld [vmem:[#allocation2 + $0x268] sm:$0xff]
    %v692 = vld [vmem:[#allocation2 + $0x270] sm:$0xff]
    %v693 = vld [vmem:[#allocation2 + $0x278] sm:$0xff]
    %v694 = vld [vmem:[#allocation2 + $0x280] sm:$0xff]
    %v695 = vld [vmem:[#allocation2 + $0x288] sm:$0xff]
    %v696 = vld [vmem:[#allocation2 + $0x290] sm:$0xff]
    %v697 = vld [vmem:[#allocation2 + $0x298] sm:$0xff]
    %v698 = vld [vmem:[#allocation2 + $0x2a0] sm:$0xff]
    %v699 = vld [vmem:[#allocation2 + $0x2a8] sm:$0xff]
    %v700 = vld [vmem:[#allocation2 + $0x2b0] sm:$0xff]
    %v701 = vld [vmem:[#allocation2 + $0x2b8] sm:$0xff]
    %v702 = vld [vmem:[#allocation2 + $0x2c0] sm:$0xff]
    %v703 = vld [vmem:[#allocation2 + $0x2c8] sm:$0xff]
    %v704 = vld [vmem:[#allocation2 + $0x2d0] sm:$0xff]
    %v705 = vld [vmem:[#allocation2 + $0x2d8] sm:$0xff]
    %v706 = vld [vmem:[#allocation2 + $0x2e0] sm:$0xff]
    %v707 = vld [vmem:[#allocation2 + $0x2e8] sm:$0xff]
    %v708 = vld [vmem:[#allocation2 + $0x2f0] sm:$0xff]
    %v709 = vld [vmem:[#allocation2 + $0x2f8] sm:$0xff]
    %v710 = vld [vmem:[#allocation2 + $0x300] sm:$0xff]
    %v711 = vld [vmem:[#allocation2 + $0x308] sm:$0xff]
    %v712 = vld [vmem:[#allocation2 + $0x310] sm:$0xff]
    %v713 = vld [vmem:[#allocation2 + $0x318] sm:$0xff]
    %v714 = vld [vmem:[#allocation2 + $0x320] sm:$0xff]
    %v715 = vld [vmem:[#allocation2 + $0x328] sm:$0xff]
    %v716 = vld [vmem:[#allocation2 + $0x330] sm:$0xff]
    %v717 = vld [vmem:[#allocation2 + $0x338] sm:$0xff]
    %v718 = vld [vmem:[#allocation2 + $0x340] sm:$0xff]
    %v719 = vld [vmem:[#allocation2 + $0x348] sm:$0xff]
    %v720 = vld [vmem:[#allocation2 + $0x350] sm:$0xff]
    %v721 = vld [vmem:[#allocation2 + $0x358] sm:$0xff]
    %v722 = vld [vmem:[#allocation2 + $0x360] sm:$0xff]
    %v723 = vld [vmem:[#allocation2 + $0x368] sm:$0xff]
    %v724 = vld [vmem:[#allocation2 + $0x370] sm:$0xff]
    %v725 = vld [vmem:[#allocation2 + $0x378] sm:$0xff]
    %v726 = vld [vmem:[#allocation2 + $0x380] sm:$0xff]
    %v727 = vld [vmem:[#allocation2 + $0x388] sm:$0xff]
    %v728 = vld [vmem:[#allocation2 + $0x390] sm:$0xff]
    %v729 = vld [vmem:[#allocation2 + $0x398] sm:$0xff]
    %v730 = vld [vmem:[#allocation2 + $0x3a0] sm:$0xff]
    %v731 = vld [vmem:[#allocation2 + $0x3a8] sm:$0xff]
    %v732 = vld [vmem:[#allocation2 + $0x3b0] sm:$0xff]
    %v733 = vld [vmem:[#allocation2 + $0x3b8] sm:$0xff]
    %v734 = vld [vmem:[#allocation2 + $0x3c0] sm:$0xff]
    %v735 = vld [vmem:[#allocation2 + $0x3c8] sm:$0xff]
    %v736 = vld [vmem:[#allocation2 + $0x3d0] sm:$0xff]
    %v737 = vld [vmem:[#allocation2 + $0x3d8] sm:$0xff]
    %v738 = vld [vmem:[#allocation2 + $0x3e0] sm:$0xff]
    %v739 = vld [vmem:[#allocation2 + $0x3e8] sm:$0xff]
    %v740 = vld [vmem:[#allocation2 + $0x3f0] sm:$0xff]
    %v741 = vld [vmem:[#allocation2 + $0x3f8] sm:$0xff]
    %v742 = vld [vmem:[#allocation2 + $0x400] sm:$0xff]
    %v743 = vld [vmem:[#allocation2 + $0x408] sm:$0xff]
    %v744 = vld [vmem:[#allocation2 + $0x410] sm:$0xff]
    %v745 = vld [vmem:[#allocation2 + $0x418] sm:$0xff]
    %v746 = vld [vmem:[#allocation2 + $0x420] sm:$0xff]
    %v747 = vld [vmem:[#allocation2 + $0x428] sm:$0xff]
    %v748 = vld [vmem:[#allocation2 + $0x430] sm:$0xff]
    %v749 = vld [vmem:[#allocation2 + $0x438] sm:$0xff]
    %v750 = vld [vmem:[#allocation2 + $0x440] sm:$0xff]
    %v751 = vld [vmem:[#allocation2 + $0x448] sm:$0xff]
    %v752 = vld [vmem:[#allocation2 + $0x450] sm:$0xff]
    %v753 = vld [vmem:[#allocation2 + $0x458] sm:$0xff]
    %v754 = vld [vmem:[#allocation2 + $0x460] sm:$0xff]
    %v755 = vld [vmem:[#allocation2 + $0x468] sm:$0xff]
    %v756 = vld [vmem:[#allocation2 + $0x470] sm:$0xff]
    %v757 = vld [vmem:[#allocation2 + $0x478] sm:$0xff]
    %v758 = vld [vmem:[#allocation2 + $0x480] sm:$0xff]
    %v759 = vld [vmem:[#allocation2 + $0x488] sm:$0xff]
    %v760 = vld [vmem:[#allocation2 + $0x490] sm:$0xff]
    %v761 = vld [vmem:[#allocation2 + $0x498] sm:$0xff]
    %v762 = vld [vmem:[#allocation2 + $0x4a0] sm:$0xff]
    %v763 = vld [vmem:[#allocation2 + $0x4a8] sm:$0xff]
    %764 = vmatpush.msra.mxu0 %v420
    %765 = vmatpush.msra.mxu0 %v417
    %766 = vmatpush.msra.mxu0 %v414
    %767 = vmatpush.msra.mxu0 %v411
    %768 = vmatpush.msra.mxu0 %v408
    %769 = vmatpush.msra.mxu0 %v405
    %770 = vmatpush.msra.mxu0 %v402
    %771 = vmatpush.msra.mxu0 %v399
    %772 = vmatpush.msra.mxu0 %v396
    %773 = vmatpush.msra.mxu0 %v393
    %774 = vmatpush.msra.mxu0 %v390
    %775 = vmatpush.msra.mxu0 %v387
    %776 = vmatpush.msra.mxu0 %v384
    %777 = vmatpush.msra.mxu0 %v381
    %778 = vmatpush.msra.mxu0 %v378
    %779 = vmatpush.msra.mxu0 %v375
    %780 = vmatmul.f32.gmra.mxu0 %v614
    %v781 = vpop.f32.mrf.mxu0
    %v782 = vadd.f32 0.0, %v781
    %783 = vmatmul.f32.gmra.mxu0 %v619
    %v784 = vpop.f32.mrf.mxu0
    %v785 = vadd.f32 0.0, %v784
    %786 = vmatmul.f32.gmra.mxu0 %v624
    %v787 = vpop.f32.mrf.mxu0
    %v788 = vadd.f32 0.0, %v787
    %789 = vmatmul.f32.gmra.mxu0 %v629
    %v790 = vpop.f32.mrf.mxu0
    %v791 = vadd.f32 0.0, %v790
    %792 = vmatmul.f32.gmra.mxu0 %v634
    %v793 = vpop.f32.mrf.mxu0
    %v794 = vadd.f32 0.0, %v793
    %795 = vmatmul.f32.gmra.mxu0 %v639
    %v796 = vpop.f32.mrf.mxu0
    %v797 = vadd.f32 0.0, %v796
    %798 = vmatmul.f32.gmra.mxu0 %v644
    %v799 = vpop.f32.mrf.mxu0
    %v800 = vadd.f32 0.0, %v799
    %801 = vmatmul.f32.gmra.mxu0 %v649
    %v802 = vpop.f32.mrf.mxu0
    %v803 = vadd.f32 0.0, %v802
    %804 = vmatmul.f32.gmra.mxu0 %v654
    %v805 = vpop.f32.mrf.mxu0
    %v806 = vadd.f32 0.0, %v805
    %807 = vmatmul.f32.gmra.mxu0 %v659
    %v808 = vpop.f32.mrf.mxu0
    %v809 = vadd.f32 0.0, %v808
    %810 = vmatmul.f32.gmra.mxu0 %v664
    %v811 = vpop.f32.mrf.mxu0
    %v812 = vadd.f32 0.0, %v811
    %813 = vmatmul.f32.gmra.mxu0 %v669
    %v814 = vpop.f32.mrf.mxu0
    %v815 = vadd.f32 0.0, %v814
    %816 = vmatmul.f32.gmra.mxu0 %v674
    %v817 = vpop.f32.mrf.mxu0
    %v818 = vadd.f32 0.0, %v817
    %819 = vmatmul.f32.gmra.mxu0 %v679
    %v820 = vpop.f32.mrf.mxu0
    %v821 = vadd.f32 0.0, %v820
    %822 = vmatmul.f32.gmra.mxu0 %v684
    %v823 = vpop.f32.mrf.mxu0
    %v824 = vadd.f32 0.0, %v823
    %825 = vmatmul.f32.gmra.mxu0 %v689
    %v826 = vpop.f32.mrf.mxu0
    %v827 = vadd.f32 0.0, %v826
    %828 = vmatmul.f32.gmra.mxu0 %v694
    %v829 = vpop.f32.mrf.mxu0
    %v830 = vadd.f32 0.0, %v829
    %831 = vmatmul.f32.gmra.mxu0 %v699
    %v832 = vpop.f32.mrf.mxu0
    %v833 = vadd.f32 0.0, %v832
    %834 = vmatmul.f32.gmra.mxu0 %v704
    %v835 = vpop.f32.mrf.mxu0
    %v836 = vadd.f32 0.0, %v835
    %837 = vmatmul.f32.gmra.mxu0 %v709
    %v838 = vpop.f32.mrf.mxu0
    %v839 = vadd.f32 0.0, %v838
    %840 = vmatmul.f32.gmra.mxu0 %v714
    %v841 = vpop.f32.mrf.mxu0
    %v842 = vadd.f32 0.0, %v841
    %843 = vmatmul.f32.gmra.mxu0 %v719
    %v844 = vpop.f32.mrf.mxu0
    %v845 = vadd.f32 0.0, %v844
    %846 = vmatmul.f32.gmra.mxu0 %v724
    %v847 = vpop.f32.mrf.mxu0
    %v848 = vadd.f32 0.0, %v847
    %849 = vmatmul.f32.gmra.mxu0 %v729
    %v850 = vpop.f32.mrf.mxu0
    %v851 = vadd.f32 0.0, %v850
    %852 = vmatmul.f32.gmra.mxu0 %v734
    %v853 = vpop.f32.mrf.mxu0
    %v854 = vadd.f32 0.0, %v853
    %855 = vmatmul.f32.gmra.mxu0 %v739
    %v856 = vpop.f32.mrf.mxu0
    %v857 = vadd.f32 0.0, %v856
    %858 = vmatmul.f32.gmra.mxu0 %v744
    %v859 = vpop.f32.mrf.mxu0
    %v860 = vadd.f32 0.0, %v859
    %861 = vmatmul.f32.gmra.mxu0 %v749
    %v862 = vpop.f32.mrf.mxu0
    %v863 = vadd.f32 0.0, %v862
    %864 = vmatmul.f32.gmra.mxu0 %v754
    %v865 = vpop.f32.mrf.mxu0
    %v866 = vadd.f32 0.0, %v865
    %867 = vmatmul.f32.gmra.mxu0 %v759
    %v868 = vpop.f32.mrf.mxu0
    %v869 = vadd.f32 0.0, %v868
    %870 = vdwg.mxu0
    %871 = vmatpush.msra.mxu0 %v468
    %872 = vmatpush.msra.mxu0 %v465
    %873 = vmatpush.msra.mxu0 %v462
    %874 = vmatpush.msra.mxu0 %v459
    %875 = vmatpush.msra.mxu0 %v456
    %876 = vmatpush.msra.mxu0 %v453
    %877 = vmatpush.msra.mxu0 %v450
    %878 = vmatpush.msra.mxu0 %v447
    %879 = vmatpush.msra.mxu0 %v444
    %880 = vmatpush.msra.mxu0 %v441
    %881 = vmatpush.msra.mxu0 %v438
    %882 = vmatpush.msra.mxu0 %v435
    %883 = vmatpush.msra.mxu0 %v432
    %884 = vmatpush.msra.mxu0 %v429
    %885 = vmatpush.msra.mxu0 %v426
    %886 = vmatpush.msra.mxu0 %v423
    %887 = vmatmul.f32.gmra.mxu0 %v615
    %v888 = vpop.f32.mrf.mxu0
    %v889 = vadd.f32 %v782, %v888
    %890 = vmatmul.f32.gmra.mxu0 %v620
    %v891 = vpop.f32.mrf.mxu0
    %v892 = vadd.f32 %v785, %v891
    %893 = vmatmul.f32.gmra.mxu0 %v625
    %v894 = vpop.f32.mrf.mxu0
    %v895 = vadd.f32 %v788, %v894
    %896 = vmatmul.f32.gmra.mxu0 %v630
    %v897 = vpop.f32.mrf.mxu0
    %v898 = vadd.f32 %v791, %v897
    %899 = vmatmul.f32.gmra.mxu0 %v635
    %v900 = vpop.f32.mrf.mxu0
    %v901 = vadd.f32 %v794, %v900
    %902 = vmatmul.f32.gmra.mxu0 %v640
    %v903 = vpop.f32.mrf.mxu0
    %v904 = vadd.f32 %v797, %v903
    %905 = vmatmul.f32.gmra.mxu0 %v645
    %v906 = vpop.f32.mrf.mxu0
    %v907 = vadd.f32 %v800, %v906
    %908 = vmatmul.f32.gmra.mxu0 %v650
    %v909 = vpop.f32.mrf.mxu0
    %v910 = vadd.f32 %v803, %v909
    %911 = vmatmul.f32.gmra.mxu0 %v655
    %v912 = vpop.f32.mrf.mxu0
    %v913 = vadd.f32 %v806, %v912
    %914 = vmatmul.f32.gmra.mxu0 %v660
    %v915 = vpop.f32.mrf.mxu0
    %v916 = vadd.f32 %v809, %v915
    %917 = vmatmul.f32.gmra.mxu0 %v665
    %v918 = vpop.f32.mrf.mxu0
    %v919 = vadd.f32 %v812, %v918
    %920 = vmatmul.f32.gmra.mxu0 %v670
    %v921 = vpop.f32.mrf.mxu0
    %v922 = vadd.f32 %v815, %v921
    %923 = vmatmul.f32.gmra.mxu0 %v675
    %v924 = vpop.f32.mrf.mxu0
    %v925 = vadd.f32 %v818, %v924
    %926 = vmatmul.f32.gmra.mxu0 %v680
    %v927 = vpop.f32.mrf.mxu0
    %v928 = vadd.f32 %v821, %v927
    %929 = vmatmul.f32.gmra.mxu0 %v685
    %v930 = vpop.f32.mrf.mxu0
    %v931 = vadd.f32 %v824, %v930
    %932 = vmatmul.f32.gmra.mxu0 %v690
    %v933 = vpop.f32.mrf.mxu0
    %v934 = vadd.f32 %v827, %v933
    %935 = vmatmul.f32.gmra.mxu0 %v695
    %v936 = vpop.f32.mrf.mxu0
    %v937 = vadd.f32 %v830, %v936
    %938 = vmatmul.f32.gmra.mxu0 %v700
    %v939 = vpop.f32.mrf.mxu0
    %v940 = vadd.f32 %v833, %v939
    %941 = vmatmul.f32.gmra.mxu0 %v705
    %v942 = vpop.f32.mrf.mxu0
    %v943 = vadd.f32 %v836, %v942
    %944 = vmatmul.f32.gmra.mxu0 %v710
    %v945 = vpop.f32.mrf.mxu0
    %v946 = vadd.f32 %v839, %v945
    %947 = vmatmul.f32.gmra.mxu0 %v715
    %v948 = vpop.f32.mrf.mxu0
    %v949 = vadd.f32 %v842, %v948
    %950 = vmatmul.f32.gmra.mxu0 %v720
    %v951 = vpop.f32.mrf.mxu0
    %v952 = vadd.f32 %v845, %v951
    %953 = vmatmul.f32.gmra.mxu0 %v725
    %v954 = vpop.f32.mrf.mxu0
    %v955 = vadd.f32 %v848, %v954
    %956 = vmatmul.f32.gmra.mxu0 %v730
    %v957 = vpop.f32.mrf.mxu0
    %v958 = vadd.f32 %v851, %v957
    %959 = vmatmul.f32.gmra.mxu0 %v735
    %v960 = vpop.f32.mrf.mxu0
    %v961 = vadd.f32 %v854, %v960
    %962 = vmatmul.f32.gmra.mxu0 %v740
    %v963 = vpop.f32.mrf.mxu0
    %v964 = vadd.f32 %v857, %v963
    %965 = vmatmul.f32.gmra.mxu0 %v745
    %v966 = vpop.f32.mrf.mxu0
    %v967 = vadd.f32 %v860, %v966
    %968 = vmatmul.f32.gmra.mxu0 %v750
    %v969 = vpop.f32.mrf.mxu0
    %v970 = vadd.f32 %v863, %v969
    %971 = vmatmul.f32.gmra.mxu0 %v755
    %v972 = vpop.f32.mrf.mxu0
    %v973 = vadd.f32 %v866, %v972
    %974 = vmatmul.f32.gmra.mxu0 %v760
    %v975 = vpop.f32.mrf.mxu0
    %v976 = vadd.f32 %v869, %v975
    %977 = vdwg.mxu0
    %978 = vmatpush.msra.mxu0 %v516
    %979 = vmatpush.msra.mxu0 %v513
    %980 = vmatpush.msra.mxu0 %v510
    %981 = vmatpush.msra.mxu0 %v507
    %982 = vmatpush.msra.mxu0 %v504
    %983 = vmatpush.msra.mxu0 %v501
    %984 = vmatpush.msra.mxu0 %v498
    %985 = vmatpush.msra.mxu0 %v495
    %986 = vmatpush.msra.mxu0 %v492
    %987 = vmatpush.msra.mxu0 %v489
    %988 = vmatpush.msra.mxu0 %v486
    %989 = vmatpush.msra.mxu0 %v483
    %990 = vmatpush.msra.mxu0 %v480
    %991 = vmatpush.msra.mxu0 %v477
    %992 = vmatpush.msra.mxu0 %v474
    %993 = vmatpush.msra.mxu0 %v471
    %994 = vmatmul.f32.gmra.mxu0 %v616
    %v995 = vpop.f32.mrf.mxu0
    %v996 = vadd.f32 %v889, %v995
    %997 = vmatmul.f32.gmra.mxu0 %v621
    %v998 = vpop.f32.mrf.mxu0
    %v999 = vadd.f32 %v892, %v998
    %1000 = vmatmul.f32.gmra.mxu0 %v626
    %v1001 = vpop.f32.mrf.mxu0
    %v1002 = vadd.f32 %v895, %v1001
    %1003 = vmatmul.f32.gmra.mxu0 %v631
    %v1004 = vpop.f32.mrf.mxu0
    %v1005 = vadd.f32 %v898, %v1004
    %1006 = vmatmul.f32.gmra.mxu0 %v636
    %v1007 = vpop.f32.mrf.mxu0
    %v1008 = vadd.f32 %v901, %v1007
    %1009 = vmatmul.f32.gmra.mxu0 %v641
    %v1010 = vpop.f32.mrf.mxu0
    %v1011 = vadd.f32 %v904, %v1010
    %1012 = vmatmul.f32.gmra.mxu0 %v646
    %v1013 = vpop.f32.mrf.mxu0
    %v1014 = vadd.f32 %v907, %v1013
    %1015 = vmatmul.f32.gmra.mxu0 %v651
    %v1016 = vpop.f32.mrf.mxu0
    %v1017 = vadd.f32 %v910, %v1016
    %1018 = vmatmul.f32.gmra.mxu0 %v656
    %v1019 = vpop.f32.mrf.mxu0
    %v1020 = vadd.f32 %v913, %v1019
    %1021 = vmatmul.f32.gmra.mxu0 %v661
    %v1022 = vpop.f32.mrf.mxu0
    %v1023 = vadd.f32 %v916, %v1022
    %1024 = vmatmul.f32.gmra.mxu0 %v666
    %v1025 = vpop.f32.mrf.mxu0
    %v1026 = vadd.f32 %v919, %v1025
    %1027 = vmatmul.f32.gmra.mxu0 %v671
    %v1028 = vpop.f32.mrf.mxu0
    %v1029 = vadd.f32 %v922, %v1028
    %1030 = vmatmul.f32.gmra.mxu0 %v676
    %v1031 = vpop.f32.mrf.mxu0
    %v1032 = vadd.f32 %v925, %v1031
    %1033 = vmatmul.f32.gmra.mxu0 %v681
    %v1034 = vpop.f32.mrf.mxu0
    %v1035 = vadd.f32 %v928, %v1034
    %1036 = vmatmul.f32.gmra.mxu0 %v686
    %v1037 = vpop.f32.mrf.mxu0
    %v1038 = vadd.f32 %v931, %v1037
    %1039 = vmatmul.f32.gmra.mxu0 %v691
    %v1040 = vpop.f32.mrf.mxu0
    %v1041 = vadd.f32 %v934, %v1040
    %1042 = vmatmul.f32.gmra.mxu0 %v696
    %v1043 = vpop.f32.mrf.mxu0
    %v1044 = vadd.f32 %v937, %v1043
    %1045 = vmatmul.f32.gmra.mxu0 %v701
    %v1046 = vpop.f32.mrf.mxu0
    %v1047 = vadd.f32 %v940, %v1046
    %1048 = vmatmul.f32.gmra.mxu0 %v706
    %v1049 = vpop.f32.mrf.mxu0
    %v1050 = vadd.f32 %v943, %v1049
    %1051 = vmatmul.f32.gmra.mxu0 %v711
    %v1052 = vpop.f32.mrf.mxu0
    %v1053 = vadd.f32 %v946, %v1052
    %1054 = vmatmul.f32.gmra.mxu0 %v716
    %v1055 = vpop.f32.mrf.mxu0
    %v1056 = vadd.f32 %v949, %v1055
    %1057 = vmatmul.f32.gmra.mxu0 %v721
    %v1058 = vpop.f32.mrf.mxu0
    %v1059 = vadd.f32 %v952, %v1058
    %1060 = vmatmul.f32.gmra.mxu0 %v726
    %v1061 = vpop.f32.mrf.mxu0
    %v1062 = vadd.f32 %v955, %v1061
    %1063 = vmatmul.f32.gmra.mxu0 %v731
    %v1064 = vpop.f32.mrf.mxu0
    %v1065 = vadd.f32 %v958, %v1064
    %1066 = vmatmul.f32.gmra.mxu0 %v736
    %v1067 = vpop.f32.mrf.mxu0
    %v1068 = vadd.f32 %v961, %v1067
    %1069 = vmatmul.f32.gmra.mxu0 %v741
    %v1070 = vpop.f32.mrf.mxu0
    %v1071 = vadd.f32 %v964, %v1070
    %1072 = vmatmul.f32.gmra.mxu0 %v746
    %v1073 = vpop.f32.mrf.mxu0
    %v1074 = vadd.f32 %v967, %v1073
    %1075 = vmatmul.f32.gmra.mxu0 %v751
    %v1076 = vpop.f32.mrf.mxu0
    %v1077 = vadd.f32 %v970, %v1076
    %1078 = vmatmul.f32.gmra.mxu0 %v756
    %v1079 = vpop.f32.mrf.mxu0
    %v1080 = vadd.f32 %v973, %v1079
    %1081 = vmatmul.f32.gmra.mxu0 %v761
    %v1082 = vpop.f32.mrf.mxu0
    %v1083 = vadd.f32 %v976, %v1082
    %1084 = vdwg.mxu0
    %1085 = vmatpush.msra.mxu0 %v564
    %1086 = vmatpush.msra.mxu0 %v561
    %1087 = vmatpush.msra.mxu0 %v558
    %1088 = vmatpush.msra.mxu0 %v555
    %1089 = vmatpush.msra.mxu0 %v552
    %1090 = vmatpush.msra.mxu0 %v549
    %1091 = vmatpush.msra.mxu0 %v546
    %1092 = vmatpush.msra.mxu0 %v543
    %1093 = vmatpush.msra.mxu0 %v540
    %1094 = vmatpush.msra.mxu0 %v537
    %1095 = vmatpush.msra.mxu0 %v534
    %1096 = vmatpush.msra.mxu0 %v531
    %1097 = vmatpush.msra.mxu0 %v528
    %1098 = vmatpush.msra.mxu0 %v525
    %1099 = vmatpush.msra.mxu0 %v522
    %1100 = vmatpush.msra.mxu0 %v519
    %1101 = vmatmul.f32.gmra.mxu0 %v617
    %v1102 = vpop.f32.mrf.mxu0
    %v1103 = vadd.f32 %v996, %v1102
    %1104 = vmatmul.f32.gmra.mxu0 %v622
    %v1105 = vpop.f32.mrf.mxu0
    %v1106 = vadd.f32 %v999, %v1105
    %1107 = vmatmul.f32.gmra.mxu0 %v627
    %v1108 = vpop.f32.mrf.mxu0
    %v1109 = vadd.f32 %v1002, %v1108
    %1110 = vmatmul.f32.gmra.mxu0 %v632
    %v1111 = vpop.f32.mrf.mxu0
    %v1112 = vadd.f32 %v1005, %v1111
    %1113 = vmatmul.f32.gmra.mxu0 %v637
    %v1114 = vpop.f32.mrf.mxu0
    %v1115 = vadd.f32 %v1008, %v1114
    %1116 = vmatmul.f32.gmra.mxu0 %v642
    %v1117 = vpop.f32.mrf.mxu0
    %v1118 = vadd.f32 %v1011, %v1117
    %1119 = vmatmul.f32.gmra.mxu0 %v647
    %v1120 = vpop.f32.mrf.mxu0
    %v1121 = vadd.f32 %v1014, %v1120
    %1122 = vmatmul.f32.gmra.mxu0 %v652
    %v1123 = vpop.f32.mrf.mxu0
    %v1124 = vadd.f32 %v1017, %v1123
    %1125 = vmatmul.f32.gmra.mxu0 %v657
    %v1126 = vpop.f32.mrf.mxu0
    %v1127 = vadd.f32 %v1020, %v1126
    %1128 = vmatmul.f32.gmra.mxu0 %v662
    %v1129 = vpop.f32.mrf.mxu0
    %v1130 = vadd.f32 %v1023, %v1129
    %1131 = vmatmul.f32.gmra.mxu0 %v667
    %v1132 = vpop.f32.mrf.mxu0
    %v1133 = vadd.f32 %v1026, %v1132
    %1134 = vmatmul.f32.gmra.mxu0 %v672
    %v1135 = vpop.f32.mrf.mxu0
    %v1136 = vadd.f32 %v1029, %v1135
    %1137 = vmatmul.f32.gmra.mxu0 %v677
    %v1138 = vpop.f32.mrf.mxu0
    %v1139 = vadd.f32 %v1032, %v1138
    %1140 = vmatmul.f32.gmra.mxu0 %v682
    %v1141 = vpop.f32.mrf.mxu0
    %v1142 = vadd.f32 %v1035, %v1141
    %1143 = vmatmul.f32.gmra.mxu0 %v687
    %v1144 = vpop.f32.mrf.mxu0
    %v1145 = vadd.f32 %v1038, %v1144
    %1146 = vmatmul.f32.gmra.mxu0 %v692
    %v1147 = vpop.f32.mrf.mxu0
    %v1148 = vadd.f32 %v1041, %v1147
    %1149 = vmatmul.f32.gmra.mxu0 %v697
    %v1150 = vpop.f32.mrf.mxu0
    %v1151 = vadd.f32 %v1044, %v1150
    %1152 = vmatmul.f32.gmra.mxu0 %v702
    %v1153 = vpop.f32.mrf.mxu0
    %v1154 = vadd.f32 %v1047, %v1153
    %1155 = vmatmul.f32.gmra.mxu0 %v707
    %v1156 = vpop.f32.mrf.mxu0
    %v1157 = vadd.f32 %v1050, %v1156
    %1158 = vmatmul.f32.gmra.mxu0 %v712
    %v1159 = vpop.f32.mrf.mxu0
    %v1160 = vadd.f32 %v1053, %v1159
    %1161 = vmatmul.f32.gmra.mxu0 %v717
    %v1162 = vpop.f32.mrf.mxu0
    %v1163 = vadd.f32 %v1056, %v1162
    %1164 = vmatmul.f32.gmra.mxu0 %v722
    %v1165 = vpop.f32.mrf.mxu0
    %v1166 = vadd.f32 %v1059, %v1165
    %1167 = vmatmul.f32.gmra.mxu0 %v727
    %v1168 = vpop.f32.mrf.mxu0
    %v1169 = vadd.f32 %v1062, %v1168
    %1170 = vmatmul.f32.gmra.mxu0 %v732
    %v1171 = vpop.f32.mrf.mxu0
    %v1172 = vadd.f32 %v1065, %v1171
    %1173 = vmatmul.f32.gmra.mxu0 %v737
    %v1174 = vpop.f32.mrf.mxu0
    %v1175 = vadd.f32 %v1068, %v1174
    %1176 = vmatmul.f32.gmra.mxu0 %v742
    %v1177 = vpop.f32.mrf.mxu0
    %v1178 = vadd.f32 %v1071, %v1177
    %1179 = vmatmul.f32.gmra.mxu0 %v747
    %v1180 = vpop.f32.mrf.mxu0
    %v1181 = vadd.f32 %v1074, %v1180
    %1182 = vmatmul.f32.gmra.mxu0 %v752
    %v1183 = vpop.f32.mrf.mxu0
    %v1184 = vadd.f32 %v1077, %v1183
    %1185 = vmatmul.f32.gmra.mxu0 %v757
    %v1186 = vpop.f32.mrf.mxu0
    %v1187 = vadd.f32 %v1080, %v1186
    %1188 = vmatmul.f32.gmra.mxu0 %v762
    %v1189 = vpop.f32.mrf.mxu0
    %v1190 = vadd.f32 %v1083, %v1189
    %1191 = vdwg.mxu0
    %1192 = vmatpush.msra.mxu0 %v612
    %1193 = vmatpush.msra.mxu0 %v609
    %1194 = vmatpush.msra.mxu0 %v606
    %1195 = vmatpush.msra.mxu0 %v603
    %1196 = vmatpush.msra.mxu0 %v600
    %1197 = vmatpush.msra.mxu0 %v597
    %1198 = vmatpush.msra.mxu0 %v594
    %1199 = vmatpush.msra.mxu0 %v591
    %1200 = vmatpush.msra.mxu0 %v588
    %1201 = vmatpush.msra.mxu0 %v585
    %1202 = vmatpush.msra.mxu0 %v582
    %1203 = vmatpush.msra.mxu0 %v579
    %1204 = vmatpush.msra.mxu0 %v576
    %1205 = vmatpush.msra.mxu0 %v573
    %1206 = vmatpush.msra.mxu0 %v570
    %1207 = vmatpush.msra.mxu0 %v567
    %1208 = vmatmul.f32.gmra.mxu0 %v618
    %v1209 = vpop.f32.mrf.mxu0
    %v1210 = vadd.f32 %v1103, %v1209
    %1211 = vmatmul.f32.gmra.mxu0 %v623
    %v1212 = vpop.f32.mrf.mxu0
    %v1213 = vadd.f32 %v1106, %v1212
    %1214 = vmatmul.f32.gmra.mxu0 %v628
    %v1215 = vpop.f32.mrf.mxu0
    %v1216 = vadd.f32 %v1109, %v1215
    %1217 = vmatmul.f32.gmra.mxu0 %v633
    %v1218 = vpop.f32.mrf.mxu0
    %v1219 = vadd.f32 %v1112, %v1218
    %1220 = vmatmul.f32.gmra.mxu0 %v638
    %v1221 = vpop.f32.mrf.mxu0
    %v1222 = vadd.f32 %v1115, %v1221
    %1223 = vmatmul.f32.gmra.mxu0 %v643
    %v1224 = vpop.f32.mrf.mxu0
    %v1225 = vadd.f32 %v1118, %v1224
    %1226 = vmatmul.f32.gmra.mxu0 %v648
    %v1227 = vpop.f32.mrf.mxu0
    %v1228 = vadd.f32 %v1121, %v1227
    %1229 = vmatmul.f32.gmra.mxu0 %v653
    %v1230 = vpop.f32.mrf.mxu0
    %v1231 = vadd.f32 %v1124, %v1230
    %1232 = vmatmul.f32.gmra.mxu0 %v658
    %v1233 = vpop.f32.mrf.mxu0
    %v1234 = vadd.f32 %v1127, %v1233
    %1235 = vmatmul.f32.gmra.mxu0 %v663
    %v1236 = vpop.f32.mrf.mxu0
    %v1237 = vadd.f32 %v1130, %v1236
    %1238 = vmatmul.f32.gmra.mxu0 %v668
    %v1239 = vpop.f32.mrf.mxu0
    %v1240 = vadd.f32 %v1133, %v1239
    %1241 = vmatmul.f32.gmra.mxu0 %v673
    %v1242 = vpop.f32.mrf.mxu0
    %v1243 = vadd.f32 %v1136, %v1242
    %1244 = vmatmul.f32.gmra.mxu0 %v678
    %v1245 = vpop.f32.mrf.mxu0
    %v1246 = vadd.f32 %v1139, %v1245
    %1247 = vmatmul.f32.gmra.mxu0 %v683
    %v1248 = vpop.f32.mrf.mxu0
    %v1249 = vadd.f32 %v1142, %v1248
    %1250 = vmatmul.f32.gmra.mxu0 %v688
    %v1251 = vpop.f32.mrf.mxu0
    %v1252 = vadd.f32 %v1145, %v1251
    %1253 = vmatmul.f32.gmra.mxu0 %v693
    %v1254 = vpop.f32.mrf.mxu0
    %v1255 = vadd.f32 %v1148, %v1254
    %1256 = vmatmul.f32.gmra.mxu0 %v698
    %v1257 = vpop.f32.mrf.mxu0
    %v1258 = vadd.f32 %v1151, %v1257
    %1259 = vmatmul.f32.gmra.mxu0 %v703
    %v1260 = vpop.f32.mrf.mxu0
    %v1261 = vadd.f32 %v1154, %v1260
    %1262 = vmatmul.f32.gmra.mxu0 %v708
    %v1263 = vpop.f32.mrf.mxu0
    %v1264 = vadd.f32 %v1157, %v1263
    %1265 = vmatmul.f32.gmra.mxu0 %v713
    %v1266 = vpop.f32.mrf.mxu0
    %v1267 = vadd.f32 %v1160, %v1266
    %1268 = vmatmul.f32.gmra.mxu0 %v718
    %v1269 = vpop.f32.mrf.mxu0
    %v1270 = vadd.f32 %v1163, %v1269
    %1271 = vmatmul.f32.gmra.mxu0 %v723
    %v1272 = vpop.f32.mrf.mxu0
    %v1273 = vadd.f32 %v1166, %v1272
    %1274 = vmatmul.f32.gmra.mxu0 %v728
    %v1275 = vpop.f32.mrf.mxu0
    %v1276 = vadd.f32 %v1169, %v1275
    %1277 = vmatmul.f32.gmra.mxu0 %v733
    %v1278 = vpop.f32.mrf.mxu0
    %v1279 = vadd.f32 %v1172, %v1278
    %1280 = vmatmul.f32.gmra.mxu0 %v738
    %v1281 = vpop.f32.mrf.mxu0
    %v1282 = vadd.f32 %v1175, %v1281
    %1283 = vmatmul.f32.gmra.mxu0 %v743
    %v1284 = vpop.f32.mrf.mxu0
    %v1285 = vadd.f32 %v1178, %v1284
    %1286 = vmatmul.f32.gmra.mxu0 %v748
    %v1287 = vpop.f32.mrf.mxu0
    %v1288 = vadd.f32 %v1181, %v1287
    %1289 = vmatmul.f32.gmra.mxu0 %v753
    %v1290 = vpop.f32.mrf.mxu0
    %v1291 = vadd.f32 %v1184, %v1290
    %1292 = vmatmul.f32.gmra.mxu0 %v758
    %v1293 = vpop.f32.mrf.mxu0
    %v1294 = vadd.f32 %v1187, %v1293
    %1295 = vmatmul.f32.gmra.mxu0 %v763
    %v1296 = vpop.f32.mrf.mxu0
    %v1297 = vadd.f32 %v1190, %v1296
    %1298 = vdwg.mxu0
    %v1299 = vmul.f32 %v1210, %v1210
    %v1300 = vmul.f32 %v1213, %v1213
    %v1301 = vmul.f32 %v1216, %v1216
    %v1302 = vmul.f32 %v1219, %v1219
    %v1303 = vmul.f32 %v1222, %v1222
    %v1304 = vmul.f32 %v1225, %v1225
    %v1305 = vmul.f32 %v1228, %v1228
    %v1306 = vmul.f32 %v1231, %v1231
    %v1307 = vmul.f32 %v1234, %v1234
    %v1308 = vmul.f32 %v1237, %v1237
    %v1309 = vmul.f32 %v1240, %v1240
    %v1310 = vmul.f32 %v1243, %v1243
    %v1311 = vmul.f32 %v1210, %v1228
    %v1312 = vmul.f32 %v1213, %v1231
    %v1313 = vmul.f32 %v1216, %v1234
    %v1314 = vmul.f32 %v1219, %v1237
    %v1315 = vmul.f32 %v1222, %v1240
    %v1316 = vmul.f32 %v1225, %v1243
    %v1317 = vsub.f32 %v1246, %v1299
    %v1318 = vsub.f32 %v1249, %v1300
    %v1319 = vsub.f32 %v1252, %v1301
    %v1320 = vsub.f32 %v1255, %v1302
    %v1321 = vsub.f32 %v1258, %v1303
    %v1322 = vsub.f32 %v1261, %v1304
    %v1323 = vsub.f32 %v1264, %v1305
    %v1324 = vsub.f32 %v1267, %v1306
    %v1325 = vsub.f32 %v1270, %v1307
    %v1326 = vsub.f32 %v1273, %v1308
    %v1327 = vsub.f32 %v1276, %v1309
    %v1328 = vsub.f32 %v1279, %v1310
    %v1329 = vsub.f32 %v1282, %v1311
    %v1330 = vsub.f32 %v1285, %v1312
    %v1331 = vsub.f32 %v1288, %v1313
    %v1332 = vsub.f32 %v1291, %v1314
    %v1333 = vsub.f32 %v1294, %v1315
    %v1334 = vsub.f32 %v1297, %v1316
    %v1335 = vmul.f32 %v1329, 2.0
    %v1336 = vmul.f32 %v1330, 2.0
    %v1337 = vmul.f32 %v1331, 2.0
    %v1338 = vmul.f32 %v1332, 2.0
    %v1339 = vmul.f32 %v1333, 2.0
    %v1340 = vmul.f32 %v1334, 2.0
    %v1341 = vadd.f32 %v1335, 0.0009
    %v1342 = vadd.f32 %v1336, 0.0009
    %v1343 = vadd.f32 %v1337, 0.0009
    %v1344 = vadd.f32 %v1338, 0.0009
    %v1345 = vadd.f32 %v1339, 0.0009
    %v1346 = vadd.f32 %v1340, 0.0009
    %v1347 = vadd.f32 %v1317, %v1323
    %v1348 = vadd.f32 %v1318, %v1324
    %v1349 = vadd.f32 %v1319, %v1325
    %v1350 = vadd.f32 %v1320, %v1326
    %v1351 = vadd.f32 %v1321, %v1327
    %v1352 = vadd.f32 %v1322, %v1328
    %v1353 = vadd.f32 %v1347, 0.0009
    %v1354 = vadd.f32 %v1348, 0.0009
    %v1355 = vadd.f32 %v1349, 0.0009
    %v1356 = vadd.f32 %v1350, 0.0009
    %v1357 = vadd.f32 %v1351, 0.0009
    %v1358 = vadd.f32 %v1352, 0.0009
    %v1359 = vmul.f32 %v1311, 2.0
    %v1360 = vmul.f32 %v1312, 2.0
    %v1361 = vmul.f32 %v1313, 2.0
    %v1362 = vmul.f32 %v1314, 2.0
    %v1363 = vmul.f32 %v1315, 2.0
    %v1364 = vmul.f32 %v1316, 2.0
    %v1365 = vadd.f32 %v1359, 0.0001
    %v1366 = vadd.f32 %v1360, 0.0001
    %v1367 = vadd.f32 %v1361, 0.0001
    %v1368 = vadd.f32 %v1362, 0.0001
    %v1369 = vadd.f32 %v1363, 0.0001
    %v1370 = vadd.f32 %v1364, 0.0001
    %v1371 = vmul.f32 %v1365, %v1341
    %v1372 = vmul.f32 %v1366, %v1342
    %v1373 = vmul.f32 %v1367, %v1343
    %v1374 = vmul.f32 %v1368, %v1344
    %v1375 = vmul.f32 %v1369, %v1345
    %v1376 = vmul.f32 %v1370, %v1346
    %v1377 = vadd.f32 %v1299, %v1305
    %v1378 = vadd.f32 %v1300, %v1306
    %v1379 = vadd.f32 %v1301, %v1307
    %v1380 = vadd.f32 %v1302, %v1308
    %v1381 = vadd.f32 %v1303, %v1309
    %v1382 = vadd.f32 %v1304, %v1310
    %v1383 = vadd.f32 %v1377, 0.0001
    %v1384 = vadd.f32 %v1378, 0.0001
    %v1385 = vadd.f32 %v1379, 0.0001
    %v1386 = vadd.f32 %v1380, 0.0001
    %v1387 = vadd.f32 %v1381, 0.0001
    %v1388 = vadd.f32 %v1382, 0.0001
    %v1389 = vmul.f32 %v1383, %v1353
    %v1390 = vmul.f32 %v1384, %v1354
    %v1391 = vmul.f32 %v1385, %v1355
    %v1392 = vmul.f32 %v1386, %v1356
    %v1393 = vmul.f32 %v1387, %v1357
    %v1394 = vmul.f32 %v1388, %v1358
    %v1395 = vrcp.pop %v1389
    %v1396 = vmul.f32 %v1389, %v1395
    %v1397 = vsub.f32 1.0, %v1396
    %v1398 = vmul.f32 %v1395, %v1397
    %v1399 = vadd.f32 %v1395, %v1398
    %vm1400 = vweird.f32 %v1389
    %vm1401 = vweird.f32 %v1395
    %vm1402 = vmor %vm1400, %vm1401
    %v1403 = vsel %vm1402, %v1395, %v1399
    %v1404 = vand.u32 2147483647, %v1389
    %vm1405 = vcmp.eq.f32.partialorder %v1404, 8.507059e+37
    %v1406 = vand.u32 %v1389, 2147483648
    %v1407 = vor.u32 1.1754944e-38, %v1406
    %v1408 = vsel %vm1405, %v1407, %v1403
    %v1409 = vmul.f32 %v1371, %v1408
    %v1410 = vrcp.pop %v1390
    %v1411 = vmul.f32 %v1390, %v1410
    %v1412 = vsub.f32 1.0, %v1411
    %v1413 = vmul.f32 %v1410, %v1412
    %v1414 = vadd.f32 %v1410, %v1413
    %vm1415 = vweird.f32 %v1390
    %vm1416 = vweird.f32 %v1410
    %vm1417 = vmor %vm1415, %vm1416
    %v1418 = vsel %vm1417, %v1410, %v1414
    %v1419 = vand.u32 2147483647, %v1390
    %vm1420 = vcmp.eq.f32.partialorder %v1419, 8.507059e+37
    %v1421 = vand.u32 %v1390, 2147483648
    %v1422 = vor.u32 1.1754944e-38, %v1421
    %v1423 = vsel %vm1420, %v1422, %v1418
    %v1424 = vmul.f32 %v1372, %v1423
    %v1425 = vrcp.pop %v1391
    %v1426 = vmul.f32 %v1391, %v1425
    %v1427 = vsub.f32 1.0, %v1426
    %v1428 = vmul.f32 %v1425, %v1427
    %v1429 = vadd.f32 %v1425, %v1428
    %vm1430 = vweird.f32 %v1391
    %vm1431 = vweird.f32 %v1425
    %vm1432 = vmor %vm1430, %vm1431
    %v1433 = vsel %vm1432, %v1425, %v1429
    %v1434 = vand.u32 2147483647, %v1391
    %vm1435 = vcmp.eq.f32.partialorder %v1434, 8.507059e+37
    %v1436 = vand.u32 %v1391, 2147483648
    %v1437 = vor.u32 1.1754944e-38, %v1436
    %v1438 = vsel %vm1435, %v1437, %v1433
    %v1439 = vmul.f32 %v1373, %v1438
    %v1440 = vrcp.pop %v1392
    %v1441 = vmul.f32 %v1392, %v1440
    %v1442 = vsub.f32 1.0, %v1441
    %v1443 = vmul.f32 %v1440, %v1442
    %v1444 = vadd.f32 %v1440, %v1443
    %vm1445 = vweird.f32 %v1392
    %vm1446 = vweird.f32 %v1440
    %vm1447 = vmor %vm1445, %vm1446
    %v1448 = vsel %vm1447, %v1440, %v1444
    %v1449 = vand.u32 2147483647, %v1392
    %vm1450 = vcmp.eq.f32.partialorder %v1449, 8.507059e+37
    %v1451 = vand.u32 %v1392, 2147483648
    %v1452 = vor.u32 1.1754944e-38, %v1451
    %v1453 = vsel %vm1450, %v1452, %v1448
    %v1454 = vmul.f32 %v1374, %v1453
    %v1455 = vrcp.pop %v1393
    %v1456 = vmul.f32 %v1393, %v1455
    %v1457 = vsub.f32 1.0, %v1456
    %v1458 = vmul.f32 %v1455, %v1457
    %v1459 = vadd.f32 %v1455, %v1458
    %vm1460 = vweird.f32 %v1393
    %vm1461 = vweird.f32 %v1455
    %vm1462 = vmor %vm1460, %vm1461
    %v1463 = vsel %vm1462, %v1455, %v1459
    %v1464 = vand.u32 2147483647, %v1393
    %vm1465 = vcmp.eq.f32.partialorder %v1464, 8.507059e+37
    %v1466 = vand.u32 %v1393, 2147483648
    %v1467 = vor.u32 1.1754944e-38, %v1466
    %v1468 = vsel %vm1465, %v1467, %v1463
    %v1469 = vmul.f32 %v1375, %v1468
    %v1470 = vrcp.pop %v1394
    %v1471 = vmul.f32 %v1394, %v1470
    %v1472 = vsub.f32 1.0, %v1471
    %v1473 = vmul.f32 %v1470, %v1472
    %v1474 = vadd.f32 %v1470, %v1473
    %vm1475 = vweird.f32 %v1394
    %vm1476 = vweird.f32 %v1470
    %vm1477 = vmor %vm1475, %vm1476
    %v1478 = vsel %vm1477, %v1470, %v1474
    %v1479 = vand.u32 2147483647, %v1394
    %vm1480 = vcmp.eq.f32.partialorder %v1479, 8.507059e+37
    %v1481 = vand.u32 %v1394, 2147483648
    %v1482 = vor.u32 1.1754944e-38, %v1481
    %v1483 = vsel %vm1480, %v1482, %v1478
    %v1484 = vmul.f32 %v1376, %v1483
    %vm1485 = vcmask 48128
    %v1486 = vsel %vm1485, %v1409, 0.0
    %v1487 = vsel %vm1485, %v1424, 0.0
    %v1488 = vadd.f32 %v1486, %v1487
    %v1489 = vsel %vm1485, %v1439, 0.0
    %v1490 = vadd.f32 %v1488, %v1489
    %v1491 = vsel %vm1485, %v1454, 0.0
    %v1492 = vadd.f32 %v1490, %v1491
    %v1493 = vsel %vm1485, %v1469, 0.0
    %v1494 = vadd.f32 %v1492, %v1493
    %v1495 = vsel %vm1485, %v1484, 0.0
    %v1496 = vadd.f32 %v1494, %v1495
    %1497 = vadd.xlane.f32.xlu0 %v1496
    %v1498 = vpop.xlane.xlu0 %1497
    %v1499 = vrot.slane %v1498, 4
    %v1500 = vadd.f32 %v1498, %v1499
    %v1501 = vrot.slane %v1500, 2
    %v1502 = vadd.f32 %v1500, %v1501
    %v1503 = vrot.slane %v1502, 1
    %v1504 = vadd.f32 %v1502, %v1503
    %s1505 = vtos %v1504
    %v1506 = vstv %s1505
    %1507 = vst [vmem:[#allocation5] sm:$0xff] %v1506
    // Predicated region
    $region22: #{tpu_custom_call.1} parent=1 // pred_check
      _
    $region23: #{tpu_custom_call.1} parent=1 // pred_check_branch
      %1509 = sbr.rel (0) target = $region25
    $region24: #{tpu_custom_call.1} parent=1 // pred_region
      %1511 = vsyncadd [#allocation4], 0
      %s1513 = sshll.u32 [#allocation5], 4
      %s1514 = int_to_ptr.vmem [resolvable:$true] %s1513
      %s1515 = sshll.u32 %s4, 4
      %s1516 = int_to_ptr.hbm [resolvable:$true] %s1515
      %1518 = dma.vmem_to_hbm [thread:$0]  %s1514, 128, %s1516, [#allocation4]
    $region25: #{tpu_custom_call.1} parent=1 // pred_fallthru
      _
    // Predicated region
    $region26: #{tpu_custom_call.1} parent=1 // pred_check
      _
    $region27: #{tpu_custom_call.1} parent=1 // pred_check_branch
      %1520 = sbr.rel (0) target = $region29
    $region28: #{tpu_custom_call.1} parent=1 // pred_region
      %1522 = dma.done [#allocation4], 128
    $region29: #{tpu_custom_call.1} parent=1 // pred_fallthru
      _
    %1523 = vsyncpa [#allocation3], 1
    %1524 = vsyncpa [#allocation4], 1

</llo_original>
